<compile_context>
chip_gen: v6e
topology: v6e:2x2x1
jax: 0.10.0
libtpu: 0.0.40
codegen_flags: <defaults>
</compile_context>

<pallas_src>
import jax
import jax.numpy as jnp
from jax.experimental import pallas as pl
from jax.experimental.pallas import tpu as pltpu


# ----------------------------------------------------------------------------
# Recurrence kernel: T_BLK time steps per grid iteration; (h, c) for all
# layers carried in vregs across the unrolled inner loop, spilled to VMEM
# scratch only at the block boundary.  Emits h_top (top-layer hidden states).
# ----------------------------------------------------------------------------
def _make_lstm_recurrence_kernel(num_layers, t_blk, hidden):
    L, H, T_BLK = num_layers, hidden, t_blk

    def kernel(*refs):
        x_ref = refs[0]                     # (T_BLK, B, E) current time block
        w = refs[1:1 + L]                   # fused (in_dim_l + H, 4H), order i,f,o,g
        b = refs[1 + L:1 + 2 * L]           # (1, 4H)
        h_top_ref = refs[1 + 2 * L]         # (T_BLK, B, H) output
        h_state = refs[2 + 2 * L]           # (L, B, H) scratch (f32)
        c_state = refs[3 + 2 * L]           # (L, B, H) scratch (f32)

        @pl.when(pl.program_id(0) == 0)
        def _():
            h_state[...] = jnp.zeros_like(h_state)
            c_state[...] = jnp.zeros_like(c_state)

        # Hoist weight/bias loads out of the time loop (constant per block).
        W = [w[l][...] for l in range(L)]
        Bv = [b[l][...] for l in range(L)]

        def step(t, carry):
            h, c = carry                    # tuples of (B, H) f32 arrays (vregs)
            inp = x_ref[t]                  # (B, E)
            new_h, new_c = [], []
            for l in range(L):
                xh = jnp.concatenate([inp, h[l]], axis=-1)       # (B, in+H)
                gates = jnp.dot(xh.astype(W[l].dtype), W[l],
                                preferred_element_type=jnp.float32) + Bv[l]
                sig = jax.nn.sigmoid(gates[:, :3 * H])           # i | f | o
                i_g = sig[:, 0 * H:1 * H]
                f_g = sig[:, 1 * H:2 * H]
                o_g = sig[:, 2 * H:3 * H]
                g_g = jnp.tanh(gates[:, 3 * H:])                 # g
                c_new = f_g * c[l] + i_g * g_g
                h_new = o_g * jnp.tanh(c_new)
                new_h.append(h_new)
                new_c.append(c_new)
                inp = h_new                                      # feed next layer
            h_top_ref[t] = inp
            return tuple(new_h), tuple(new_c)

        h0 = tuple(h_state[l] for l in range(L))
        c0 = tuple(c_state[l] for l in range(L))
        hf, cf = jax.lax.fori_loop(0, T_BLK, step, (h0, c0), unroll=True)

        # Spill state once per block (for the next grid iteration).
        for l in range(L):
            h_state[l] = hf[l]
            c_state[l] = cf[l]

    return kernel


# ----------------------------------------------------------------------------
# Projection kernel (time-independent, megacore-parallel row tiles).
# ----------------------------------------------------------------------------
def _proj_kernel(h_ref, w_ref, b_ref, out_ref):
    h = h_ref[...]
    out_ref[...] = (
        jnp.dot(h.astype(w_ref.dtype), w_ref[...],
                preferred_element_type=jnp.float32)
        + b_ref[...]
    )


# ----------------------------------------------------------------------------
# Wrapper: embedding gather + concat (plain-JAX glue), weight packing, then
# the two Pallas calls.
# ----------------------------------------------------------------------------
def rnn_inception_forward(features, captions, params, *, t_blk=8,
                          compute_dtype=jnp.float32):
    L = len(params["w_ih"])
    H = params["w_hh"][0].shape[0]
    V = params["w_lin"].shape[1]

    # Embedding lookup; Dropout(p=0.5) in eval mode == identity.
    emb = params["embedding"][captions]                              # (Tc, B, E)
    x = jnp.concatenate([features[None, :, :].astype(emb.dtype), emb], axis=0)
    x = x.astype(jnp.float32)
    T, B, E = x.shape

    # ---- pack weights: fuse [W_ih; W_hh], permute gates (i,f,g,o)->(i,f,o,g)
    # (at real sizes this packing would be precomputed once, not per call).
    def perm_gates(a):
        return jnp.concatenate(
            [a[..., 0:2 * H], a[..., 3 * H:4 * H], a[..., 2 * H:3 * H]], axis=-1)

    w_fused, b_fused = [], []
    for l in range(L):
        wf = jnp.concatenate([params["w_ih"][l], params["w_hh"][l]], axis=0)
        w_fused.append(perm_gates(wf).astype(compute_dtype))
        b_fused.append(perm_gates(params["b"][l]).astype(jnp.float32))

    # ---- pad T to a multiple of t_blk (padding is only in the final block,
    # so padded steps never feed real state).
    T_pad = pl.cdiv(T, t_blk) * t_blk
    if T_pad != T:
        x = jnp.concatenate([x, jnp.zeros((T_pad - T, B, E), x.dtype)], axis=0)

    # ---- recurrence: sequential over time blocks -------------------------
    kernel = _make_lstm_recurrence_kernel(L, t_blk, H)

    inputs = [x] + w_fused + b_fused
    in_specs = [pl.BlockSpec((t_blk, B, E), lambda i: (i, 0, 0))]
    for arr in w_fused + b_fused:
        in_specs.append(pl.BlockSpec(arr.shape, lambda i: (0, 0)))

    h_top = pl.pallas_call(
        kernel,
        out_shape=jax.ShapeDtypeStruct((T_pad, B, H), jnp.float32),
        grid_spec=pltpu.PrefetchScalarGridSpec(
            num_scalar_prefetch=0,
            grid=(T_pad // t_blk,),
            in_specs=in_specs,
            out_specs=pl.BlockSpec((t_blk, B, H), lambda i: (i, 0, 0)),
            scratch_shapes=[
                pltpu.VMEM((L, B, H), jnp.float32),   # h state per layer
                pltpu.VMEM((L, B, H), jnp.float32),   # c state per layer
            ],
        ),
        compiler_params=pltpu.CompilerParams(
            dimension_semantics=("arbitrary",)        # time recurrence -> sequential
        ),
    )(*inputs)

    # ---- output projection: parallel over (T_pad*B) row tiles ------------
    w_lin = params["w_lin"].astype(compute_dtype)
    b_lin = params["b_lin"].astype(jnp.float32)
    rows = T_pad * B
    h_flat = h_top.reshape(rows, H)
    r_blk = 8 if rows % 8 == 0 else rows

    logits = pl.pallas_call(
        _proj_kernel,
        out_shape=jax.ShapeDtypeStruct((rows, V), jnp.float32),
        grid_spec=pltpu.PrefetchScalarGridSpec(
            num_scalar_prefetch=0,
            grid=(rows // r_blk,),
            in_specs=[
                pl.BlockSpec((r_blk, H), lambda i: (i, 0)),
                pl.BlockSpec(w_lin.shape, lambda i: (0, 0)),
                pl.BlockSpec(b_lin.shape, lambda i: (0, 0)),
            ],
            out_specs=pl.BlockSpec((r_blk, V), lambda i: (i, 0)),
        ),
        compiler_params=pltpu.CompilerParams(
            dimension_semantics=("parallel",)         # v7x: both TensorCores
        ),
    )(h_flat, w_lin, b_lin)

    return logits.reshape(T_pad, B, V)[:T]


# ----------------------------------------------------------------------------
# Pure-JAX reference (lax.scan LSTM, PyTorch gate order) for correctness check.
# ----------------------------------------------------------------------------
def reference_forward(features, captions, params):
    emb = params["embedding"][captions]
    x = jnp.concatenate([features[None, :, :], emb], axis=0).astype(jnp.float32)
    L = len(params["w_ih"])
    B = x.shape[1]
    H = params["w_hh"][0].shape[0]

    h0 = jnp.zeros((L, B, H), jnp.float32)
    c0 = jnp.zeros((L, B, H), jnp.float32)
    hp = jax.lax.Precision.HIGHEST

    def step(carry, x_t):
        h, c = carry
        inp = x_t
        hs, cs = [], []
        for l in range(L):
            gates = (jnp.dot(inp, params["w_ih"][l], precision=hp)
                     + jnp.dot(h[l], params["w_hh"][l], precision=hp)
                     + params["b"][l])
            i_g = jax.nn.sigmoid(gates[:, 0 * H:1 * H])
            f_g = jax.nn.sigmoid(gates[:, 1 * H:2 * H])
            g_g = jnp.tanh(gates[:, 2 * H:3 * H])
            o_g = jax.nn.sigmoid(gates[:, 3 * H:4 * H])
            c_new = f_g * c[l] + i_g * g_g
            h_new = o_g * jnp.tanh(c_new)
            hs.append(h_new)
            cs.append(c_new)
            inp = h_new
        return (jnp.stack(hs), jnp.stack(cs)), inp

    (_, _), h_out = jax.lax.scan(step, (h0, c0), x)
    return jnp.dot(h_out, params["w_lin"], precision=hp) + params["b_lin"]


# ----------------------------------------------------------------------------
# Deterministic parameter init (shapes from the PyTorch __init__, PyTorch
# gate convention i,f,g,o; weights stored transposed for x @ W).
# ----------------------------------------------------------------------------
def init_params(key, embed_size, hidden_size, vocab_size, num_layers):
    n_keys = 1 + 4 * num_layers + 2
    keys = iter(jax.random.split(key, n_keys))
    u = lambda k, shape: jax.random.uniform(k, shape, jnp.float32, -0.1, 0.1)

    params = {
        "embedding": u(next(keys), (vocab_size, embed_size)),
        "w_ih": [], "w_hh": [], "b": [],
    }
    for l in range(num_layers):
        in_dim = embed_size if l == 0 else hidden_size
        params["w_ih"].append(u(next(keys), (in_dim, 4 * hidden_size)))
        params["w_hh"].append(u(next(keys), (hidden_size, 4 * hidden_size)))
        b_ih = u(next(keys), (4 * hidden_size,))
        b_hh = u(next(keys), (4 * hidden_size,))
        params["b"].append((b_ih + b_hh)[None, :])               # (1, 4H)
    params["w_lin"] = u(next(keys), (hidden_size, vocab_size))   # (H, V)
    params["b_lin"] = u(next(keys), (vocab_size,))[None, :]      # (1, V)
    return params


if __name__ == "__main__":
    # Small shapes consistent with the module's forward:
    #   features: (batch, embed)   captions: (seq, batch) int ids
    embed_size, hidden_size, vocab_size, num_layers = 16, 32, 128, 2
    batch, seq_len = 2, 8

    key = jax.random.PRNGKey(0)
    k_par, k_feat, k_cap = jax.random.split(key, 3)

    params = init_params(k_par, embed_size, hidden_size, vocab_size, num_layers)
    features = jax.random.normal(k_feat, (batch, embed_size), jnp.float32)
    captions = jax.random.randint(k_cap, (seq_len, batch), 0, vocab_size, jnp.int32)

    # t_blk=8 -> grid=(2,) over time blocks: exercises the cross-block state
    # carry path.  compute_dtype=jnp.bfloat16 is the recommended v6e/v7x mode.
    out = rnn_inception_forward(features, captions, params, t_blk=8,
                                compute_dtype=jnp.float32)
    out = jax.block_until_ready(out)

    assert out.shape == (seq_len + 1, batch, vocab_size), out.shape

    ref = jax.block_until_ready(reference_forward(features, captions, params))
    assert jnp.allclose(out, ref, rtol=2e-2, atol=2e-2), (
        float(jnp.max(jnp.abs(out - ref)))
    )

    print("KERNEL_OK")
</pallas_src>

<mosaic_0001>
module attributes {stable_mosaic.version = 11 : i64} {
  func.func @kernel(%arg0: i32, %arg1: memref<8x2x16xf32, #tpu.memory_space<vmem>>, %arg2: memref<48x128xf32, #tpu.memory_space<vmem>>, %arg3: memref<64x128xf32, #tpu.memory_space<vmem>>, %arg4: memref<1x128xf32, #tpu.memory_space<vmem>>, %arg5: memref<1x128xf32, #tpu.memory_space<vmem>>, %arg6: memref<8x2x32xf32, #tpu.memory_space<vmem>>, %arg7: memref<2x2x32xf32, #tpu.memory_space<vmem>>, %arg8: memref<2x2x32xf32, #tpu.memory_space<vmem>>) attributes {dimension_semantics = [#tpu.dimension_semantics<arbitrary>], iteration_bounds = array<i64: 2>, scalar_prefetch = 0 : i64, scratch_operands = 2 : i64, tpu.core_type = #tpu.core_type<tc>, window_params = [{transform_indices = @transform_0, window_bounds = array<i64: 8, 2, 16>}, {pipeline_mode = #tpu.pipeline_mode<synchronous>, transform_indices = @transform_1, window_bounds = array<i64: 48, 128>}, {pipeline_mode = #tpu.pipeline_mode<synchronous>, transform_indices = @transform_2, window_bounds = array<i64: 64, 128>}, {pipeline_mode = #tpu.pipeline_mode<synchronous>, transform_indices = @transform_3, window_bounds = array<i64: 1, 128>}, {pipeline_mode = #tpu.pipeline_mode<synchronous>, transform_indices = @transform_4, window_bounds = array<i64: 1, 128>}, {transform_indices = @transform_5, window_bounds = array<i64: 8, 2, 32>}]} {
    %c0_i32 = arith.constant 0 : i32
    %0 = arith.cmpi eq, %arg0, %c0_i32 : i32
    %1 = arith.extui %0 : i1 to i32
    %c0_i32_0 = arith.constant 0 : i32
    %2 = arith.cmpi ne, %1, %c0_i32_0 : i32
    scf.if %2 {
      %cst_95 = arith.constant 0.000000e+00 : f32
      %403 = vector.broadcast %cst_95 : f32 to vector<2x2x32xf32>
      %c0_96 = arith.constant 0 : index
      %c0_97 = arith.constant 0 : index
      %c0_98 = arith.constant 0 : index
      %404 = vector.load %arg7[%c0_96, %c0_97, %c0_98] : memref<2x2x32xf32, #tpu.memory_space<vmem>>, vector<2x2x32xf32>
      tpu.vector_store %arg7[%c0_96, %c0_97, %c0_98], %403 {strides = array<i32>} : memref<2x2x32xf32, #tpu.memory_space<vmem>>, vector<2x2x32xf32>,
      %cst_99 = arith.constant 0.000000e+00 : f32
      %405 = vector.broadcast %cst_99 : f32 to vector<2x2x32xf32>
      %c0_100 = arith.constant 0 : index
      %c0_101 = arith.constant 0 : index
      %c0_102 = arith.constant 0 : index
      %406 = vector.load %arg8[%c0_100, %c0_101, %c0_102] : memref<2x2x32xf32, #tpu.memory_space<vmem>>, vector<2x2x32xf32>
      tpu.vector_store %arg8[%c0_100, %c0_101, %c0_102], %405 {strides = array<i32>} : memref<2x2x32xf32, #tpu.memory_space<vmem>>, vector<2x2x32xf32>,
    } else {
    }
    %c0 = arith.constant 0 : index
    %c0_1 = arith.constant 0 : index
    %3 = vector.load %arg2[%c0, %c0_1] : memref<48x128xf32, #tpu.memory_space<vmem>>, vector<48x128xf32>
    %c0_2 = arith.constant 0 : index
    %c0_3 = arith.constant 0 : index
    %4 = vector.load %arg3[%c0_2, %c0_3] : memref<64x128xf32, #tpu.memory_space<vmem>>, vector<64x128xf32>
    %c0_4 = arith.constant 0 : index
    %c0_5 = arith.constant 0 : index
    %5 = vector.load %arg4[%c0_4, %c0_5] : memref<1x128xf32, #tpu.memory_space<vmem>>, vector<1x128xf32>
    %c0_6 = arith.constant 0 : index
    %c0_7 = arith.constant 0 : index
    %6 = vector.load %arg5[%c0_6, %c0_7] : memref<1x128xf32, #tpu.memory_space<vmem>>, vector<1x128xf32>
    %c0_8 = arith.constant 0 : index
    %c0_9 = arith.constant 0 : index
    %c0_10 = arith.constant 0 : index
    %7 = vector.load %arg7[%c0_8, %c0_9, %c0_10] : memref<2x2x32xf32, #tpu.memory_space<vmem>>, vector<1x2x32xf32>
    %8 = vector.shape_cast %7 : vector<1x2x32xf32> to vector<2x32xf32>
    %c1 = arith.constant 1 : index
    %c0_11 = arith.constant 0 : index
    %c0_12 = arith.constant 0 : index
    %9 = vector.load %arg7[%c1, %c0_11, %c0_12] : memref<2x2x32xf32, #tpu.memory_space<vmem>>, vector<1x2x32xf32>
    %10 = vector.shape_cast %9 : vector<1x2x32xf32> to vector<2x32xf32>
    %c0_13 = arith.constant 0 : index
    %c0_14 = arith.constant 0 : index
    %c0_15 = arith.constant 0 : index
    %11 = vector.load %arg8[%c0_13, %c0_14, %c0_15] : memref<2x2x32xf32, #tpu.memory_space<vmem>>, vector<1x2x32xf32>
    %12 = vector.shape_cast %11 : vector<1x2x32xf32> to vector<2x32xf32>
    %c1_16 = arith.constant 1 : index
    %c0_17 = arith.constant 0 : index
    %c0_18 = arith.constant 0 : index
    %13 = vector.load %arg8[%c1_16, %c0_17, %c0_18] : memref<2x2x32xf32, #tpu.memory_space<vmem>>, vector<1x2x32xf32>
    %14 = vector.shape_cast %13 : vector<1x2x32xf32> to vector<2x32xf32>
    %c0_i32_19 = arith.constant 0 : i32
    %15 = arith.index_cast %c0_i32_19 : i32 to index
    %c0_20 = arith.constant 0 : index
    %c0_21 = arith.constant 0 : index
    %16 = vector.load %arg1[%15, %c0_20, %c0_21] : memref<8x2x16xf32, #tpu.memory_space<vmem>>, vector<1x2x16xf32>
    %17 = vector.shape_cast %16 : vector<1x2x16xf32> to vector<2x16xf32>
    %18 = tpu.concatenate %17, %8 in 1 : vector<2x16xf32>, vector<2x32xf32> -> vector<2x48xf32>
    %cst = arith.constant dense<0.000000e+00> : vector<2x128xf32>
    %19 = tpu.matmul %18, %3, %cst {dimension_numbers = #tpu.dot_dimension_numbers<[1], [0], [0], [1], [0, 0, 1, 1], [], []>} : vector<2x48xf32>, vector<48x128xf32>, vector<2x128xf32> -> vector<2x128xf32>
    %20 = vector.broadcast %5 : vector<1x128xf32> to vector<2x128xf32>
    %21 = arith.addf %19, %20 : vector<2x128xf32>
    %22 = vector.extract_strided_slice %21 {offsets = [0, 0], sizes = [2, 96], strides = [1, 1]} : vector<2x128xf32> to vector<2x96xf32>
    %23 = arith.negf %22 : vector<2x96xf32>
    %24 = math.exp %23 : vector<2x96xf32>
    %cst_22 = arith.constant 1.000000e+00 : f32
    %25 = vector.broadcast %cst_22 : f32 to vector<2x96xf32>
    %26 = arith.addf %25, %24 : vector<2x96xf32>
    %27 = arith.divf %25, %26 : vector<2x96xf32>
    %28 = vector.extract_strided_slice %27 {offsets = [0, 0], sizes = [2, 32], strides = [1, 1]} : vector<2x96xf32> to vector<2x32xf32>
    %29 = vector.extract_strided_slice %27 {offsets = [0, 32], sizes = [2, 32], strides = [1, 1]} : vector<2x96xf32> to vector<2x32xf32>
    %30 = vector.extract_strided_slice %27 {offsets = [0, 64], sizes = [2, 32], strides = [1, 1]} : vector<2x96xf32> to vector<2x32xf32>
    %31 = vector.extract_strided_slice %21 {offsets = [0, 96], sizes = [2, 32], strides = [1, 1]} : vector<2x128xf32> to vector<2x32xf32>
    %32 = math.tanh %31 : vector<2x32xf32>
    %33 = arith.mulf %29, %12 : vector<2x32xf32>
    %34 = arith.mulf %28, %32 : vector<2x32xf32>
    %35 = arith.addf %33, %34 : vector<2x32xf32>
    %36 = math.tanh %35 : vector<2x32xf32>
    %37 = arith.mulf %30, %36 : vector<2x32xf32>
    %38 = tpu.concatenate %37, %10 in 1 : vector<2x32xf32>, vector<2x32xf32> -> vector<2x64xf32>
    %cst_23 = arith.constant dense<0.000000e+00> : vector<2x128xf32>
    %39 = tpu.matmul %38, %4, %cst_23 {dimension_numbers = #tpu.dot_dimension_numbers<[1], [0], [0], [1], [0, 0, 1, 1], [], []>} : vector<2x64xf32>, vector<64x128xf32>, vector<2x128xf32> -> vector<2x128xf32>
    %40 = vector.broadcast %6 : vector<1x128xf32> to vector<2x128xf32>
    %41 = arith.addf %39, %40 : vector<2x128xf32>
    %42 = vector.extract_strided_slice %41 {offsets = [0, 0], sizes = [2, 96], strides = [1, 1]} : vector<2x128xf32> to vector<2x96xf32>
    %43 = arith.negf %42 : vector<2x96xf32>
    %44 = math.exp %43 : vector<2x96xf32>
    %cst_24 = arith.constant 1.000000e+00 : f32
    %45 = vector.broadcast %cst_24 : f32 to vector<2x96xf32>
    %46 = arith.addf %45, %44 : vector<2x96xf32>
    %47 = arith.divf %45, %46 : vector<2x96xf32>
    %48 = vector.extract_strided_slice %47 {offsets = [0, 0], sizes = [2, 32], strides = [1, 1]} : vector<2x96xf32> to vector<2x32xf32>
    %49 = vector.extract_strided_slice %47 {offsets = [0, 32], sizes = [2, 32], strides = [1, 1]} : vector<2x96xf32> to vector<2x32xf32>
    %50 = vector.extract_strided_slice %47 {offsets = [0, 64], sizes = [2, 32], strides = [1, 1]} : vector<2x96xf32> to vector<2x32xf32>
    %51 = vector.extract_strided_slice %41 {offsets = [0, 96], sizes = [2, 32], strides = [1, 1]} : vector<2x128xf32> to vector<2x32xf32>
    %52 = math.tanh %51 : vector<2x32xf32>
    %53 = arith.mulf %49, %14 : vector<2x32xf32>
    %54 = arith.mulf %48, %52 : vector<2x32xf32>
    %55 = arith.addf %53, %54 : vector<2x32xf32>
    %56 = math.tanh %55 : vector<2x32xf32>
    %57 = arith.mulf %50, %56 : vector<2x32xf32>
    %58 = arith.index_cast %c0_i32_19 : i32 to index
    %c0_25 = arith.constant 0 : index
    %c0_26 = arith.constant 0 : index
    %59 = vector.load %arg6[%58, %c0_25, %c0_26] : memref<8x2x32xf32, #tpu.memory_space<vmem>>, vector<1x2x32xf32>
    %60 = vector.shape_cast %59 : vector<1x2x32xf32> to vector<2x32xf32>
    %61 = vector.shape_cast %57 : vector<2x32xf32> to vector<1x2x32xf32>
    tpu.vector_store %arg6[%58, %c0_25, %c0_26], %61 {strides = array<i32>} : memref<8x2x32xf32, #tpu.memory_space<vmem>>, vector<1x2x32xf32>,
    %c1_i32 = arith.constant 1 : i32
    %62 = arith.index_cast %c1_i32 : i32 to index
    %c0_27 = arith.constant 0 : index
    %c0_28 = arith.constant 0 : index
    %63 = vector.load %arg1[%62, %c0_27, %c0_28] : memref<8x2x16xf32, #tpu.memory_space<vmem>>, vector<1x2x16xf32>
    %64 = vector.shape_cast %63 : vector<1x2x16xf32> to vector<2x16xf32>
    %65 = tpu.concatenate %64, %37 in 1 : vector<2x16xf32>, vector<2x32xf32> -> vector<2x48xf32>
    %cst_29 = arith.constant dense<0.000000e+00> : vector<2x128xf32>
    %66 = tpu.matmul %65, %3, %cst_29 {dimension_numbers = #tpu.dot_dimension_numbers<[1], [0], [0], [1], [0, 0, 1, 1], [], []>} : vector<2x48xf32>, vector<48x128xf32>, vector<2x128xf32> -> vector<2x128xf32>
    %67 = vector.broadcast %5 : vector<1x128xf32> to vector<2x128xf32>
    %68 = arith.addf %66, %67 : vector<2x128xf32>
    %69 = vector.extract_strided_slice %68 {offsets = [0, 0], sizes = [2, 96], strides = [1, 1]} : vector<2x128xf32> to vector<2x96xf32>
    %70 = arith.negf %69 : vector<2x96xf32>
    %71 = math.exp %70 : vector<2x96xf32>
    %cst_30 = arith.constant 1.000000e+00 : f32
    %72 = vector.broadcast %cst_30 : f32 to vector<2x96xf32>
    %73 = arith.addf %72, %71 : vector<2x96xf32>
    %74 = arith.divf %72, %73 : vector<2x96xf32>
    %75 = vector.extract_strided_slice %74 {offsets = [0, 0], sizes = [2, 32], strides = [1, 1]} : vector<2x96xf32> to vector<2x32xf32>
    %76 = vector.extract_strided_slice %74 {offsets = [0, 32], sizes = [2, 32], strides = [1, 1]} : vector<2x96xf32> to vector<2x32xf32>
    %77 = vector.extract_strided_slice %74 {offsets = [0, 64], sizes = [2, 32], strides = [1, 1]} : vector<2x96xf32> to vector<2x32xf32>
    %78 = vector.extract_strided_slice %68 {offsets = [0, 96], sizes = [2, 32], strides = [1, 1]} : vector<2x128xf32> to vector<2x32xf32>
    %79 = math.tanh %78 : vector<2x32xf32>
    %80 = arith.mulf %76, %35 : vector<2x32xf32>
    %81 = arith.mulf %75, %79 : vector<2x32xf32>
    %82 = arith.addf %80, %81 : vector<2x32xf32>
    %83 = math.tanh %82 : vector<2x32xf32>
    %84 = arith.mulf %77, %83 : vector<2x32xf32>
    %85 = tpu.concatenate %84, %57 in 1 : vector<2x32xf32>, vector<2x32xf32> -> vector<2x64xf32>
    %cst_31 = arith.constant dense<0.000000e+00> : vector<2x128xf32>
    %86 = tpu.matmul %85, %4, %cst_31 {dimension_numbers = #tpu.dot_dimension_numbers<[1], [0], [0], [1], [0, 0, 1, 1], [], []>} : vector<2x64xf32>, vector<64x128xf32>, vector<2x128xf32> -> vector<2x128xf32>
    %87 = vector.broadcast %6 : vector<1x128xf32> to vector<2x128xf32>
    %88 = arith.addf %86, %87 : vector<2x128xf32>
    %89 = vector.extract_strided_slice %88 {offsets = [0, 0], sizes = [2, 96], strides = [1, 1]} : vector<2x128xf32> to vector<2x96xf32>
    %90 = arith.negf %89 : vector<2x96xf32>
    %91 = math.exp %90 : vector<2x96xf32>
    %cst_32 = arith.constant 1.000000e+00 : f32
    %92 = vector.broadcast %cst_32 : f32 to vector<2x96xf32>
    %93 = arith.addf %92, %91 : vector<2x96xf32>
    %94 = arith.divf %92, %93 : vector<2x96xf32>
    %95 = vector.extract_strided_slice %94 {offsets = [0, 0], sizes = [2, 32], strides = [1, 1]} : vector<2x96xf32> to vector<2x32xf32>
    %96 = vector.extract_strided_slice %94 {offsets = [0, 32], sizes = [2, 32], strides = [1, 1]} : vector<2x96xf32> to vector<2x32xf32>
    %97 = vector.extract_strided_slice %94 {offsets = [0, 64], sizes = [2, 32], strides = [1, 1]} : vector<2x96xf32> to vector<2x32xf32>
    %98 = vector.extract_strided_slice %88 {offsets = [0, 96], sizes = [2, 32], strides = [1, 1]} : vector<2x128xf32> to vector<2x32xf32>
    %99 = math.tanh %98 : vector<2x32xf32>
    %100 = arith.mulf %96, %55 : vector<2x32xf32>
    %101 = arith.mulf %95, %99 : vector<2x32xf32>
    %102 = arith.addf %100, %101 : vector<2x32xf32>
    %103 = math.tanh %102 : vector<2x32xf32>
    %104 = arith.mulf %97, %103 : vector<2x32xf32>
    %105 = arith.index_cast %c1_i32 : i32 to index
    %c0_33 = arith.constant 0 : index
    %c0_34 = arith.constant 0 : index
    %106 = vector.load %arg6[%105, %c0_33, %c0_34] : memref<8x2x32xf32, #tpu.memory_space<vmem>>, vector<1x2x32xf32>
    %107 = vector.shape_cast %106 : vector<1x2x32xf32> to vector<2x32xf32>
    %108 = vector.shape_cast %104 : vector<2x32xf32> to vector<1x2x32xf32>
    tpu.vector_store %arg6[%105, %c0_33, %c0_34], %108 {strides = array<i32>} : memref<8x2x32xf32, #tpu.memory_space<vmem>>, vector<1x2x32xf32>,
    %c2_i32 = arith.constant 2 : i32
    %109 = arith.index_cast %c2_i32 : i32 to index
    %c0_35 = arith.constant 0 : index
    %c0_36 = arith.constant 0 : index
    %110 = vector.load %arg1[%109, %c0_35, %c0_36] : memref<8x2x16xf32, #tpu.memory_space<vmem>>, vector<1x2x16xf32>
    %111 = vector.shape_cast %110 : vector<1x2x16xf32> to vector<2x16xf32>
    %112 = tpu.concatenate %111, %84 in 1 : vector<2x16xf32>, vector<2x32xf32> -> vector<2x48xf32>
    %cst_37 = arith.constant dense<0.000000e+00> : vector<2x128xf32>
    %113 = tpu.matmul %112, %3, %cst_37 {dimension_numbers = #tpu.dot_dimension_numbers<[1], [0], [0], [1], [0, 0, 1, 1], [], []>} : vector<2x48xf32>, vector<48x128xf32>, vector<2x128xf32> -> vector<2x128xf32>
    %114 = vector.broadcast %5 : vector<1x128xf32> to vector<2x128xf32>
    %115 = arith.addf %113, %114 : vector<2x128xf32>
    %116 = vector.extract_strided_slice %115 {offsets = [0, 0], sizes = [2, 96], strides = [1, 1]} : vector<2x128xf32> to vector<2x96xf32>
    %117 = arith.negf %116 : vector<2x96xf32>
    %118 = math.exp %117 : vector<2x96xf32>
    %cst_38 = arith.constant 1.000000e+00 : f32
    %119 = vector.broadcast %cst_38 : f32 to vector<2x96xf32>
    %120 = arith.addf %119, %118 : vector<2x96xf32>
    %121 = arith.divf %119, %120 : vector<2x96xf32>
    %122 = vector.extract_strided_slice %121 {offsets = [0, 0], sizes = [2, 32], strides = [1, 1]} : vector<2x96xf32> to vector<2x32xf32>
    %123 = vector.extract_strided_slice %121 {offsets = [0, 32], sizes = [2, 32], strides = [1, 1]} : vector<2x96xf32> to vector<2x32xf32>
    %124 = vector.extract_strided_slice %121 {offsets = [0, 64], sizes = [2, 32], strides = [1, 1]} : vector<2x96xf32> to vector<2x32xf32>
    %125 = vector.extract_strided_slice %115 {offsets = [0, 96], sizes = [2, 32], strides = [1, 1]} : vector<2x128xf32> to vector<2x32xf32>
    %126 = math.tanh %125 : vector<2x32xf32>
    %127 = arith.mulf %123, %82 : vector<2x32xf32>
    %128 = arith.mulf %122, %126 : vector<2x32xf32>
    %129 = arith.addf %127, %128 : vector<2x32xf32>
    %130 = math.tanh %129 : vector<2x32xf32>
    %131 = arith.mulf %124, %130 : vector<2x32xf32>
    %132 = tpu.concatenate %131, %104 in 1 : vector<2x32xf32>, vector<2x32xf32> -> vector<2x64xf32>
    %cst_39 = arith.constant dense<0.000000e+00> : vector<2x128xf32>
    %133 = tpu.matmul %132, %4, %cst_39 {dimension_numbers = #tpu.dot_dimension_numbers<[1], [0], [0], [1], [0, 0, 1, 1], [], []>} : vector<2x64xf32>, vector<64x128xf32>, vector<2x128xf32> -> vector<2x128xf32>
    %134 = vector.broadcast %6 : vector<1x128xf32> to vector<2x128xf32>
    %135 = arith.addf %133, %134 : vector<2x128xf32>
    %136 = vector.extract_strided_slice %135 {offsets = [0, 0], sizes = [2, 96], strides = [1, 1]} : vector<2x128xf32> to vector<2x96xf32>
    %137 = arith.negf %136 : vector<2x96xf32>
    %138 = math.exp %137 : vector<2x96xf32>
    %cst_40 = arith.constant 1.000000e+00 : f32
    %139 = vector.broadcast %cst_40 : f32 to vector<2x96xf32>
    %140 = arith.addf %139, %138 : vector<2x96xf32>
    %141 = arith.divf %139, %140 : vector<2x96xf32>
    %142 = vector.extract_strided_slice %141 {offsets = [0, 0], sizes = [2, 32], strides = [1, 1]} : vector<2x96xf32> to vector<2x32xf32>
    %143 = vector.extract_strided_slice %141 {offsets = [0, 32], sizes = [2, 32], strides = [1, 1]} : vector<2x96xf32> to vector<2x32xf32>
    %144 = vector.extract_strided_slice %141 {offsets = [0, 64], sizes = [2, 32], strides = [1, 1]} : vector<2x96xf32> to vector<2x32xf32>
    %145 = vector.extract_strided_slice %135 {offsets = [0, 96], sizes = [2, 32], strides = [1, 1]} : vector<2x128xf32> to vector<2x32xf32>
    %146 = math.tanh %145 : vector<2x32xf32>
    %147 = arith.mulf %143, %102 : vector<2x32xf32>
    %148 = arith.mulf %142, %146 : vector<2x32xf32>
    %149 = arith.addf %147, %148 : vector<2x32xf32>
    %150 = math.tanh %149 : vector<2x32xf32>
    %151 = arith.mulf %144, %150 : vector<2x32xf32>
    %152 = arith.index_cast %c2_i32 : i32 to index
    %c0_41 = arith.constant 0 : index
    %c0_42 = arith.constant 0 : index
    %153 = vector.load %arg6[%152, %c0_41, %c0_42] : memref<8x2x32xf32, #tpu.memory_space<vmem>>, vector<1x2x32xf32>
    %154 = vector.shape_cast %153 : vector<1x2x32xf32> to vector<2x32xf32>
    %155 = vector.shape_cast %151 : vector<2x32xf32> to vector<1x2x32xf32>
    tpu.vector_store %arg6[%152, %c0_41, %c0_42], %155 {strides = array<i32>} : memref<8x2x32xf32, #tpu.memory_space<vmem>>, vector<1x2x32xf32>,
    %c3_i32 = arith.constant 3 : i32
    %156 = arith.index_cast %c3_i32 : i32 to index
    %c0_43 = arith.constant 0 : index
    %c0_44 = arith.constant 0 : index
    %157 = vector.load %arg1[%156, %c0_43, %c0_44] : memref<8x2x16xf32, #tpu.memory_space<vmem>>, vector<1x2x16xf32>
    %158 = vector.shape_cast %157 : vector<1x2x16xf32> to vector<2x16xf32>
    %159 = tpu.concatenate %158, %131 in 1 : vector<2x16xf32>, vector<2x32xf32> -> vector<2x48xf32>
    %cst_45 = arith.constant dense<0.000000e+00> : vector<2x128xf32>
    %160 = tpu.matmul %159, %3, %cst_45 {dimension_numbers = #tpu.dot_dimension_numbers<[1], [0], [0], [1], [0, 0, 1, 1], [], []>} : vector<2x48xf32>, vector<48x128xf32>, vector<2x128xf32> -> vector<2x128xf32>
    %161 = vector.broadcast %5 : vector<1x128xf32> to vector<2x128xf32>
    %162 = arith.addf %160, %161 : vector<2x128xf32>
    %163 = vector.extract_strided_slice %162 {offsets = [0, 0], sizes = [2, 96], strides = [1, 1]} : vector<2x128xf32> to vector<2x96xf32>
    %164 = arith.negf %163 : vector<2x96xf32>
    %165 = math.exp %164 : vector<2x96xf32>
    %cst_46 = arith.constant 1.000000e+00 : f32
    %166 = vector.broadcast %cst_46 : f32 to vector<2x96xf32>
    %167 = arith.addf %166, %165 : vector<2x96xf32>
    %168 = arith.divf %166, %167 : vector<2x96xf32>
    %169 = vector.extract_strided_slice %168 {offsets = [0, 0], sizes = [2, 32], strides = [1, 1]} : vector<2x96xf32> to vector<2x32xf32>
    %170 = vector.extract_strided_slice %168 {offsets = [0, 32], sizes = [2, 32], strides = [1, 1]} : vector<2x96xf32> to vector<2x32xf32>
    %171 = vector.extract_strided_slice %168 {offsets = [0, 64], sizes = [2, 32], strides = [1, 1]} : vector<2x96xf32> to vector<2x32xf32>
    %172 = vector.extract_strided_slice %162 {offsets = [0, 96], sizes = [2, 32], strides = [1, 1]} : vector<2x128xf32> to vector<2x32xf32>
    %173 = math.tanh %172 : vector<2x32xf32>
    %174 = arith.mulf %170, %129 : vector<2x32xf32>
    %175 = arith.mulf %169, %173 : vector<2x32xf32>
    %176 = arith.addf %174, %175 : vector<2x32xf32>
    %177 = math.tanh %176 : vector<2x32xf32>
    %178 = arith.mulf %171, %177 : vector<2x32xf32>
    %179 = tpu.concatenate %178, %151 in 1 : vector<2x32xf32>, vector<2x32xf32> -> vector<2x64xf32>
    %cst_47 = arith.constant dense<0.000000e+00> : vector<2x128xf32>
    %180 = tpu.matmul %179, %4, %cst_47 {dimension_numbers = #tpu.dot_dimension_numbers<[1], [0], [0], [1], [0, 0, 1, 1], [], []>} : vector<2x64xf32>, vector<64x128xf32>, vector<2x128xf32> -> vector<2x128xf32>
    %181 = vector.broadcast %6 : vector<1x128xf32> to vector<2x128xf32>
    %182 = arith.addf %180, %181 : vector<2x128xf32>
    %183 = vector.extract_strided_slice %182 {offsets = [0, 0], sizes = [2, 96], strides = [1, 1]} : vector<2x128xf32> to vector<2x96xf32>
    %184 = arith.negf %183 : vector<2x96xf32>
    %185 = math.exp %184 : vector<2x96xf32>
    %cst_48 = arith.constant 1.000000e+00 : f32
    %186 = vector.broadcast %cst_48 : f32 to vector<2x96xf32>
    %187 = arith.addf %186, %185 : vector<2x96xf32>
    %188 = arith.divf %186, %187 : vector<2x96xf32>
    %189 = vector.extract_strided_slice %188 {offsets = [0, 0], sizes = [2, 32], strides = [1, 1]} : vector<2x96xf32> to vector<2x32xf32>
    %190 = vector.extract_strided_slice %188 {offsets = [0, 32], sizes = [2, 32], strides = [1, 1]} : vector<2x96xf32> to vector<2x32xf32>
    %191 = vector.extract_strided_slice %188 {offsets = [0, 64], sizes = [2, 32], strides = [1, 1]} : vector<2x96xf32> to vector<2x32xf32>
    %192 = vector.extract_strided_slice %182 {offsets = [0, 96], sizes = [2, 32], strides = [1, 1]} : vector<2x128xf32> to vector<2x32xf32>
    %193 = math.tanh %192 : vector<2x32xf32>
    %194 = arith.mulf %190, %149 : vector<2x32xf32>
    %195 = arith.mulf %189, %193 : vector<2x32xf32>
    %196 = arith.addf %194, %195 : vector<2x32xf32>
    %197 = math.tanh %196 : vector<2x32xf32>
    %198 = arith.mulf %191, %197 : vector<2x32xf32>
    %199 = arith.index_cast %c3_i32 : i32 to index
    %c0_49 = arith.constant 0 : index
    %c0_50 = arith.constant 0 : index
    %200 = vector.load %arg6[%199, %c0_49, %c0_50] : memref<8x2x32xf32, #tpu.memory_space<vmem>>, vector<1x2x32xf32>
    %201 = vector.shape_cast %200 : vector<1x2x32xf32> to vector<2x32xf32>
    %202 = vector.shape_cast %198 : vector<2x32xf32> to vector<1x2x32xf32>
    tpu.vector_store %arg6[%199, %c0_49, %c0_50], %202 {strides = array<i32>} : memref<8x2x32xf32, #tpu.memory_space<vmem>>, vector<1x2x32xf32>,
    %c4_i32 = arith.constant 4 : i32
    %203 = arith.index_cast %c4_i32 : i32 to index
    %c0_51 = arith.constant 0 : index
    %c0_52 = arith.constant 0 : index
    %204 = vector.load %arg1[%203, %c0_51, %c0_52] : memref<8x2x16xf32, #tpu.memory_space<vmem>>, vector<1x2x16xf32>
    %205 = vector.shape_cast %204 : vector<1x2x16xf32> to vector<2x16xf32>
    %206 = tpu.concatenate %205, %178 in 1 : vector<2x16xf32>, vector<2x32xf32> -> vector<2x48xf32>
    %cst_53 = arith.constant dense<0.000000e+00> : vector<2x128xf32>
    %207 = tpu.matmul %206, %3, %cst_53 {dimension_numbers = #tpu.dot_dimension_numbers<[1], [0], [0], [1], [0, 0, 1, 1], [], []>} : vector<2x48xf32>, vector<48x128xf32>, vector<2x128xf32> -> vector<2x128xf32>
    %208 = vector.broadcast %5 : vector<1x128xf32> to vector<2x128xf32>
    %209 = arith.addf %207, %208 : vector<2x128xf32>
    %210 = vector.extract_strided_slice %209 {offsets = [0, 0], sizes = [2, 96], strides = [1, 1]} : vector<2x128xf32> to vector<2x96xf32>
    %211 = arith.negf %210 : vector<2x96xf32>
    %212 = math.exp %211 : vector<2x96xf32>
    %cst_54 = arith.constant 1.000000e+00 : f32
    %213 = vector.broadcast %cst_54 : f32 to vector<2x96xf32>
    %214 = arith.addf %213, %212 : vector<2x96xf32>
    %215 = arith.divf %213, %214 : vector<2x96xf32>
    %216 = vector.extract_strided_slice %215 {offsets = [0, 0], sizes = [2, 32], strides = [1, 1]} : vector<2x96xf32> to vector<2x32xf32>
    %217 = vector.extract_strided_slice %215 {offsets = [0, 32], sizes = [2, 32], strides = [1, 1]} : vector<2x96xf32> to vector<2x32xf32>
    %218 = vector.extract_strided_slice %215 {offsets = [0, 64], sizes = [2, 32], strides = [1, 1]} : vector<2x96xf32> to vector<2x32xf32>
    %219 = vector.extract_strided_slice %209 {offsets = [0, 96], sizes = [2, 32], strides = [1, 1]} : vector<2x128xf32> to vector<2x32xf32>
    %220 = math.tanh %219 : vector<2x32xf32>
    %221 = arith.mulf %217, %176 : vector<2x32xf32>
    %222 = arith.mulf %216, %220 : vector<2x32xf32>
    %223 = arith.addf %221, %222 : vector<2x32xf32>
    %224 = math.tanh %223 : vector<2x32xf32>
    %225 = arith.mulf %218, %224 : vector<2x32xf32>
    %226 = tpu.concatenate %225, %198 in 1 : vector<2x32xf32>, vector<2x32xf32> -> vector<2x64xf32>
    %cst_55 = arith.constant dense<0.000000e+00> : vector<2x128xf32>
    %227 = tpu.matmul %226, %4, %cst_55 {dimension_numbers = #tpu.dot_dimension_numbers<[1], [0], [0], [1], [0, 0, 1, 1], [], []>} : vector<2x64xf32>, vector<64x128xf32>, vector<2x128xf32> -> vector<2x128xf32>
    %228 = vector.broadcast %6 : vector<1x128xf32> to vector<2x128xf32>
    %229 = arith.addf %227, %228 : vector<2x128xf32>
    %230 = vector.extract_strided_slice %229 {offsets = [0, 0], sizes = [2, 96], strides = [1, 1]} : vector<2x128xf32> to vector<2x96xf32>
    %231 = arith.negf %230 : vector<2x96xf32>
    %232 = math.exp %231 : vector<2x96xf32>
    %cst_56 = arith.constant 1.000000e+00 : f32
    %233 = vector.broadcast %cst_56 : f32 to vector<2x96xf32>
    %234 = arith.addf %233, %232 : vector<2x96xf32>
    %235 = arith.divf %233, %234 : vector<2x96xf32>
    %236 = vector.extract_strided_slice %235 {offsets = [0, 0], sizes = [2, 32], strides = [1, 1]} : vector<2x96xf32> to vector<2x32xf32>
    %237 = vector.extract_strided_slice %235 {offsets = [0, 32], sizes = [2, 32], strides = [1, 1]} : vector<2x96xf32> to vector<2x32xf32>
    %238 = vector.extract_strided_slice %235 {offsets = [0, 64], sizes = [2, 32], strides = [1, 1]} : vector<2x96xf32> to vector<2x32xf32>
    %239 = vector.extract_strided_slice %229 {offsets = [0, 96], sizes = [2, 32], strides = [1, 1]} : vector<2x128xf32> to vector<2x32xf32>
    %240 = math.tanh %239 : vector<2x32xf32>
    %241 = arith.mulf %237, %196 : vector<2x32xf32>
    %242 = arith.mulf %236, %240 : vector<2x32xf32>
    %243 = arith.addf %241, %242 : vector<2x32xf32>
    %244 = math.tanh %243 : vector<2x32xf32>
    %245 = arith.mulf %238, %244 : vector<2x32xf32>
    %246 = arith.index_cast %c4_i32 : i32 to index
    %c0_57 = arith.constant 0 : index
    %c0_58 = arith.constant 0 : index
    %247 = vector.load %arg6[%246, %c0_57, %c0_58] : memref<8x2x32xf32, #tpu.memory_space<vmem>>, vector<1x2x32xf32>
    %248 = vector.shape_cast %247 : vector<1x2x32xf32> to vector<2x32xf32>
    %249 = vector.shape_cast %245 : vector<2x32xf32> to vector<1x2x32xf32>
    tpu.vector_store %arg6[%246, %c0_57, %c0_58], %249 {strides = array<i32>} : memref<8x2x32xf32, #tpu.memory_space<vmem>>, vector<1x2x32xf32>,
    %c5_i32 = arith.constant 5 : i32
    %250 = arith.index_cast %c5_i32 : i32 to index
    %c0_59 = arith.constant 0 : index
    %c0_60 = arith.constant 0 : index
    %251 = vector.load %arg1[%250, %c0_59, %c0_60] : memref<8x2x16xf32, #tpu.memory_space<vmem>>, vector<1x2x16xf32>
    %252 = vector.shape_cast %251 : vector<1x2x16xf32> to vector<2x16xf32>
    %253 = tpu.concatenate %252, %225 in 1 : vector<2x16xf32>, vector<2x32xf32> -> vector<2x48xf32>
    %cst_61 = arith.constant dense<0.000000e+00> : vector<2x128xf32>
    %254 = tpu.matmul %253, %3, %cst_61 {dimension_numbers = #tpu.dot_dimension_numbers<[1], [0], [0], [1], [0, 0, 1, 1], [], []>} : vector<2x48xf32>, vector<48x128xf32>, vector<2x128xf32> -> vector<2x128xf32>
    %255 = vector.broadcast %5 : vector<1x128xf32> to vector<2x128xf32>
    %256 = arith.addf %254, %255 : vector<2x128xf32>
    %257 = vector.extract_strided_slice %256 {offsets = [0, 0], sizes = [2, 96], strides = [1, 1]} : vector<2x128xf32> to vector<2x96xf32>
    %258 = arith.negf %257 : vector<2x96xf32>
    %259 = math.exp %258 : vector<2x96xf32>
    %cst_62 = arith.constant 1.000000e+00 : f32
    %260 = vector.broadcast %cst_62 : f32 to vector<2x96xf32>
    %261 = arith.addf %260, %259 : vector<2x96xf32>
    %262 = arith.divf %260, %261 : vector<2x96xf32>
    %263 = vector.extract_strided_slice %262 {offsets = [0, 0], sizes = [2, 32], strides = [1, 1]} : vector<2x96xf32> to vector<2x32xf32>
    %264 = vector.extract_strided_slice %262 {offsets = [0, 32], sizes = [2, 32], strides = [1, 1]} : vector<2x96xf32> to vector<2x32xf32>
    %265 = vector.extract_strided_slice %262 {offsets = [0, 64], sizes = [2, 32], strides = [1, 1]} : vector<2x96xf32> to vector<2x32xf32>
    %266 = vector.extract_strided_slice %256 {offsets = [0, 96], sizes = [2, 32], strides = [1, 1]} : vector<2x128xf32> to vector<2x32xf32>
    %267 = math.tanh %266 : vector<2x32xf32>
    %268 = arith.mulf %264, %223 : vector<2x32xf32>
    %269 = arith.mulf %263, %267 : vector<2x32xf32>
    %270 = arith.addf %268, %269 : vector<2x32xf32>
    %271 = math.tanh %270 : vector<2x32xf32>
    %272 = arith.mulf %265, %271 : vector<2x32xf32>
    %273 = tpu.concatenate %272, %245 in 1 : vector<2x32xf32>, vector<2x32xf32> -> vector<2x64xf32>
    %cst_63 = arith.constant dense<0.000000e+00> : vector<2x128xf32>
    %274 = tpu.matmul %273, %4, %cst_63 {dimension_numbers = #tpu.dot_dimension_numbers<[1], [0], [0], [1], [0, 0, 1, 1], [], []>} : vector<2x64xf32>, vector<64x128xf32>, vector<2x128xf32> -> vector<2x128xf32>
    %275 = vector.broadcast %6 : vector<1x128xf32> to vector<2x128xf32>
    %276 = arith.addf %274, %275 : vector<2x128xf32>
    %277 = vector.extract_strided_slice %276 {offsets = [0, 0], sizes = [2, 96], strides = [1, 1]} : vector<2x128xf32> to vector<2x96xf32>
    %278 = arith.negf %277 : vector<2x96xf32>
    %279 = math.exp %278 : vector<2x96xf32>
    %cst_64 = arith.constant 1.000000e+00 : f32
    %280 = vector.broadcast %cst_64 : f32 to vector<2x96xf32>
    %281 = arith.addf %280, %279 : vector<2x96xf32>
    %282 = arith.divf %280, %281 : vector<2x96xf32>
    %283 = vector.extract_strided_slice %282 {offsets = [0, 0], sizes = [2, 32], strides = [1, 1]} : vector<2x96xf32> to vector<2x32xf32>
    %284 = vector.extract_strided_slice %282 {offsets = [0, 32], sizes = [2, 32], strides = [1, 1]} : vector<2x96xf32> to vector<2x32xf32>
    %285 = vector.extract_strided_slice %282 {offsets = [0, 64], sizes = [2, 32], strides = [1, 1]} : vector<2x96xf32> to vector<2x32xf32>
    %286 = vector.extract_strided_slice %276 {offsets = [0, 96], sizes = [2, 32], strides = [1, 1]} : vector<2x128xf32> to vector<2x32xf32>
    %287 = math.tanh %286 : vector<2x32xf32>
    %288 = arith.mulf %284, %243 : vector<2x32xf32>
    %289 = arith.mulf %283, %287 : vector<2x32xf32>
    %290 = arith.addf %288, %289 : vector<2x32xf32>
    %291 = math.tanh %290 : vector<2x32xf32>
    %292 = arith.mulf %285, %291 : vector<2x32xf32>
    %293 = arith.index_cast %c5_i32 : i32 to index
    %c0_65 = arith.constant 0 : index
    %c0_66 = arith.constant 0 : index
    %294 = vector.load %arg6[%293, %c0_65, %c0_66] : memref<8x2x32xf32, #tpu.memory_space<vmem>>, vector<1x2x32xf32>
    %295 = vector.shape_cast %294 : vector<1x2x32xf32> to vector<2x32xf32>
    %296 = vector.shape_cast %292 : vector<2x32xf32> to vector<1x2x32xf32>
    tpu.vector_store %arg6[%293, %c0_65, %c0_66], %296 {strides = array<i32>} : memref<8x2x32xf32, #tpu.memory_space<vmem>>, vector<1x2x32xf32>,
    %c6_i32 = arith.constant 6 : i32
    %297 = arith.index_cast %c6_i32 : i32 to index
    %c0_67 = arith.constant 0 : index
    %c0_68 = arith.constant 0 : index
    %298 = vector.load %arg1[%297, %c0_67, %c0_68] : memref<8x2x16xf32, #tpu.memory_space<vmem>>, vector<1x2x16xf32>
    %299 = vector.shape_cast %298 : vector<1x2x16xf32> to vector<2x16xf32>
    %300 = tpu.concatenate %299, %272 in 1 : vector<2x16xf32>, vector<2x32xf32> -> vector<2x48xf32>
    %cst_69 = arith.constant dense<0.000000e+00> : vector<2x128xf32>
    %301 = tpu.matmul %300, %3, %cst_69 {dimension_numbers = #tpu.dot_dimension_numbers<[1], [0], [0], [1], [0, 0, 1, 1], [], []>} : vector<2x48xf32>, vector<48x128xf32>, vector<2x128xf32> -> vector<2x128xf32>
    %302 = vector.broadcast %5 : vector<1x128xf32> to vector<2x128xf32>
    %303 = arith.addf %301, %302 : vector<2x128xf32>
    %304 = vector.extract_strided_slice %303 {offsets = [0, 0], sizes = [2, 96], strides = [1, 1]} : vector<2x128xf32> to vector<2x96xf32>
    %305 = arith.negf %304 : vector<2x96xf32>
    %306 = math.exp %305 : vector<2x96xf32>
    %cst_70 = arith.constant 1.000000e+00 : f32
    %307 = vector.broadcast %cst_70 : f32 to vector<2x96xf32>
    %308 = arith.addf %307, %306 : vector<2x96xf32>
    %309 = arith.divf %307, %308 : vector<2x96xf32>
    %310 = vector.extract_strided_slice %309 {offsets = [0, 0], sizes = [2, 32], strides = [1, 1]} : vector<2x96xf32> to vector<2x32xf32>
    %311 = vector.extract_strided_slice %309 {offsets = [0, 32], sizes = [2, 32], strides = [1, 1]} : vector<2x96xf32> to vector<2x32xf32>
    %312 = vector.extract_strided_slice %309 {offsets = [0, 64], sizes = [2, 32], strides = [1, 1]} : vector<2x96xf32> to vector<2x32xf32>
    %313 = vector.extract_strided_slice %303 {offsets = [0, 96], sizes = [2, 32], strides = [1, 1]} : vector<2x128xf32> to vector<2x32xf32>
    %314 = math.tanh %313 : vector<2x32xf32>
    %315 = arith.mulf %311, %270 : vector<2x32xf32>
    %316 = arith.mulf %310, %314 : vector<2x32xf32>
    %317 = arith.addf %315, %316 : vector<2x32xf32>
    %318 = math.tanh %317 : vector<2x32xf32>
    %319 = arith.mulf %312, %318 : vector<2x32xf32>
    %320 = tpu.concatenate %319, %292 in 1 : vector<2x32xf32>, vector<2x32xf32> -> vector<2x64xf32>
    %cst_71 = arith.constant dense<0.000000e+00> : vector<2x128xf32>
    %321 = tpu.matmul %320, %4, %cst_71 {dimension_numbers = #tpu.dot_dimension_numbers<[1], [0], [0], [1], [0, 0, 1, 1], [], []>} : vector<2x64xf32>, vector<64x128xf32>, vector<2x128xf32> -> vector<2x128xf32>
    %322 = vector.broadcast %6 : vector<1x128xf32> to vector<2x128xf32>
    %323 = arith.addf %321, %322 : vector<2x128xf32>
    %324 = vector.extract_strided_slice %323 {offsets = [0, 0], sizes = [2, 96], strides = [1, 1]} : vector<2x128xf32> to vector<2x96xf32>
    %325 = arith.negf %324 : vector<2x96xf32>
    %326 = math.exp %325 : vector<2x96xf32>
    %cst_72 = arith.constant 1.000000e+00 : f32
    %327 = vector.broadcast %cst_72 : f32 to vector<2x96xf32>
    %328 = arith.addf %327, %326 : vector<2x96xf32>
    %329 = arith.divf %327, %328 : vector<2x96xf32>
    %330 = vector.extract_strided_slice %329 {offsets = [0, 0], sizes = [2, 32], strides = [1, 1]} : vector<2x96xf32> to vector<2x32xf32>
    %331 = vector.extract_strided_slice %329 {offsets = [0, 32], sizes = [2, 32], strides = [1, 1]} : vector<2x96xf32> to vector<2x32xf32>
    %332 = vector.extract_strided_slice %329 {offsets = [0, 64], sizes = [2, 32], strides = [1, 1]} : vector<2x96xf32> to vector<2x32xf32>
    %333 = vector.extract_strided_slice %323 {offsets = [0, 96], sizes = [2, 32], strides = [1, 1]} : vector<2x128xf32> to vector<2x32xf32>
    %334 = math.tanh %333 : vector<2x32xf32>
    %335 = arith.mulf %331, %290 : vector<2x32xf32>
    %336 = arith.mulf %330, %334 : vector<2x32xf32>
    %337 = arith.addf %335, %336 : vector<2x32xf32>
    %338 = math.tanh %337 : vector<2x32xf32>
    %339 = arith.mulf %332, %338 : vector<2x32xf32>
    %340 = arith.index_cast %c6_i32 : i32 to index
    %c0_73 = arith.constant 0 : index
    %c0_74 = arith.constant 0 : index
    %341 = vector.load %arg6[%340, %c0_73, %c0_74] : memref<8x2x32xf32, #tpu.memory_space<vmem>>, vector<1x2x32xf32>
    %342 = vector.shape_cast %341 : vector<1x2x32xf32> to vector<2x32xf32>
    %343 = vector.shape_cast %339 : vector<2x32xf32> to vector<1x2x32xf32>
    tpu.vector_store %arg6[%340, %c0_73, %c0_74], %343 {strides = array<i32>} : memref<8x2x32xf32, #tpu.memory_space<vmem>>, vector<1x2x32xf32>,
    %c7_i32 = arith.constant 7 : i32
    %344 = arith.index_cast %c7_i32 : i32 to index
    %c0_75 = arith.constant 0 : index
    %c0_76 = arith.constant 0 : index
    %345 = vector.load %arg1[%344, %c0_75, %c0_76] : memref<8x2x16xf32, #tpu.memory_space<vmem>>, vector<1x2x16xf32>
    %346 = vector.shape_cast %345 : vector<1x2x16xf32> to vector<2x16xf32>
    %347 = tpu.concatenate %346, %319 in 1 : vector<2x16xf32>, vector<2x32xf32> -> vector<2x48xf32>
    %cst_77 = arith.constant dense<0.000000e+00> : vector<2x128xf32>
    %348 = tpu.matmul %347, %3, %cst_77 {dimension_numbers = #tpu.dot_dimension_numbers<[1], [0], [0], [1], [0, 0, 1, 1], [], []>} : vector<2x48xf32>, vector<48x128xf32>, vector<2x128xf32> -> vector<2x128xf32>
    %349 = vector.broadcast %5 : vector<1x128xf32> to vector<2x128xf32>
    %350 = arith.addf %348, %349 : vector<2x128xf32>
    %351 = vector.extract_strided_slice %350 {offsets = [0, 0], sizes = [2, 96], strides = [1, 1]} : vector<2x128xf32> to vector<2x96xf32>
    %352 = arith.negf %351 : vector<2x96xf32>
    %353 = math.exp %352 : vector<2x96xf32>
    %cst_78 = arith.constant 1.000000e+00 : f32
    %354 = vector.broadcast %cst_78 : f32 to vector<2x96xf32>
    %355 = arith.addf %354, %353 : vector<2x96xf32>
    %356 = arith.divf %354, %355 : vector<2x96xf32>
    %357 = vector.extract_strided_slice %356 {offsets = [0, 0], sizes = [2, 32], strides = [1, 1]} : vector<2x96xf32> to vector<2x32xf32>
    %358 = vector.extract_strided_slice %356 {offsets = [0, 32], sizes = [2, 32], strides = [1, 1]} : vector<2x96xf32> to vector<2x32xf32>
    %359 = vector.extract_strided_slice %356 {offsets = [0, 64], sizes = [2, 32], strides = [1, 1]} : vector<2x96xf32> to vector<2x32xf32>
    %360 = vector.extract_strided_slice %350 {offsets = [0, 96], sizes = [2, 32], strides = [1, 1]} : vector<2x128xf32> to vector<2x32xf32>
    %361 = math.tanh %360 : vector<2x32xf32>
    %362 = arith.mulf %358, %317 : vector<2x32xf32>
    %363 = arith.mulf %357, %361 : vector<2x32xf32>
    %364 = arith.addf %362, %363 : vector<2x32xf32>
    %365 = math.tanh %364 : vector<2x32xf32>
    %366 = arith.mulf %359, %365 : vector<2x32xf32>
    %367 = tpu.concatenate %366, %339 in 1 : vector<2x32xf32>, vector<2x32xf32> -> vector<2x64xf32>
    %cst_79 = arith.constant dense<0.000000e+00> : vector<2x128xf32>
    %368 = tpu.matmul %367, %4, %cst_79 {dimension_numbers = #tpu.dot_dimension_numbers<[1], [0], [0], [1], [0, 0, 1, 1], [], []>} : vector<2x64xf32>, vector<64x128xf32>, vector<2x128xf32> -> vector<2x128xf32>
    %369 = vector.broadcast %6 : vector<1x128xf32> to vector<2x128xf32>
    %370 = arith.addf %368, %369 : vector<2x128xf32>
    %371 = vector.extract_strided_slice %370 {offsets = [0, 0], sizes = [2, 96], strides = [1, 1]} : vector<2x128xf32> to vector<2x96xf32>
    %372 = arith.negf %371 : vector<2x96xf32>
    %373 = math.exp %372 : vector<2x96xf32>
    %cst_80 = arith.constant 1.000000e+00 : f32
    %374 = vector.broadcast %cst_80 : f32 to vector<2x96xf32>
    %375 = arith.addf %374, %373 : vector<2x96xf32>
    %376 = arith.divf %374, %375 : vector<2x96xf32>
    %377 = vector.extract_strided_slice %376 {offsets = [0, 0], sizes = [2, 32], strides = [1, 1]} : vector<2x96xf32> to vector<2x32xf32>
    %378 = vector.extract_strided_slice %376 {offsets = [0, 32], sizes = [2, 32], strides = [1, 1]} : vector<2x96xf32> to vector<2x32xf32>
    %379 = vector.extract_strided_slice %376 {offsets = [0, 64], sizes = [2, 32], strides = [1, 1]} : vector<2x96xf32> to vector<2x32xf32>
    %380 = vector.extract_strided_slice %370 {offsets = [0, 96], sizes = [2, 32], strides = [1, 1]} : vector<2x128xf32> to vector<2x32xf32>
    %381 = math.tanh %380 : vector<2x32xf32>
    %382 = arith.mulf %378, %337 : vector<2x32xf32>
    %383 = arith.mulf %377, %381 : vector<2x32xf32>
    %384 = arith.addf %382, %383 : vector<2x32xf32>
    %385 = math.tanh %384 : vector<2x32xf32>
    %386 = arith.mulf %379, %385 : vector<2x32xf32>
    %387 = arith.index_cast %c7_i32 : i32 to index
    %c0_81 = arith.constant 0 : index
    %c0_82 = arith.constant 0 : index
    %388 = vector.load %arg6[%387, %c0_81, %c0_82] : memref<8x2x32xf32, #tpu.memory_space<vmem>>, vector<1x2x32xf32>
    %389 = vector.shape_cast %388 : vector<1x2x32xf32> to vector<2x32xf32>
    %390 = vector.shape_cast %386 : vector<2x32xf32> to vector<1x2x32xf32>
    tpu.vector_store %arg6[%387, %c0_81, %c0_82], %390 {strides = array<i32>} : memref<8x2x32xf32, #tpu.memory_space<vmem>>, vector<1x2x32xf32>,
    %c8_i32 = arith.constant 8 : i32
    %c0_83 = arith.constant 0 : index
    %c0_84 = arith.constant 0 : index
    %c0_85 = arith.constant 0 : index
    %391 = vector.load %arg7[%c0_83, %c0_84, %c0_85] : memref<2x2x32xf32, #tpu.memory_space<vmem>>, vector<1x2x32xf32>
    %392 = vector.shape_cast %391 : vector<1x2x32xf32> to vector<2x32xf32>
    %393 = vector.shape_cast %366 : vector<2x32xf32> to vector<1x2x32xf32>
    tpu.vector_store %arg7[%c0_83, %c0_84, %c0_85], %393 {strides = array<i32>} : memref<2x2x32xf32, #tpu.memory_space<vmem>>, vector<1x2x32xf32>,
    %c0_86 = arith.constant 0 : index
    %c0_87 = arith.constant 0 : index
    %c0_88 = arith.constant 0 : index
    %394 = vector.load %arg8[%c0_86, %c0_87, %c0_88] : memref<2x2x32xf32, #tpu.memory_space<vmem>>, vector<1x2x32xf32>
    %395 = vector.shape_cast %394 : vector<1x2x32xf32> to vector<2x32xf32>
    %396 = vector.shape_cast %364 : vector<2x32xf32> to vector<1x2x32xf32>
    tpu.vector_store %arg8[%c0_86, %c0_87, %c0_88], %396 {strides = array<i32>} : memref<2x2x32xf32, #tpu.memory_space<vmem>>, vector<1x2x32xf32>,
    %c1_89 = arith.constant 1 : index
    %c0_90 = arith.constant 0 : index
    %c0_91 = arith.constant 0 : index
    %397 = vector.load %arg7[%c1_89, %c0_90, %c0_91] : memref<2x2x32xf32, #tpu.memory_space<vmem>>, vector<1x2x32xf32>
    %398 = vector.shape_cast %397 : vector<1x2x32xf32> to vector<2x32xf32>
    %399 = vector.shape_cast %386 : vector<2x32xf32> to vector<1x2x32xf32>
    tpu.vector_store %arg7[%c1_89, %c0_90, %c0_91], %399 {strides = array<i32>} : memref<2x2x32xf32, #tpu.memory_space<vmem>>, vector<1x2x32xf32>,
    %c1_92 = arith.constant 1 : index
    %c0_93 = arith.constant 0 : index
    %c0_94 = arith.constant 0 : index
    %400 = vector.load %arg8[%c1_92, %c0_93, %c0_94] : memref<2x2x32xf32, #tpu.memory_space<vmem>>, vector<1x2x32xf32>
    %401 = vector.shape_cast %400 : vector<1x2x32xf32> to vector<2x32xf32>
    %402 = vector.shape_cast %384 : vector<2x32xf32> to vector<1x2x32xf32>
    tpu.vector_store %arg8[%c1_92, %c0_93, %c0_94], %402 {strides = array<i32>} : memref<2x2x32xf32, #tpu.memory_space<vmem>>, vector<1x2x32xf32>,
    return
  }
  func.func @transform_0(%arg0: i32) -> (i32, i32, i32) {
    %c0_i32 = arith.constant 0 : i32
    %c0_i32_0 = arith.constant 0 : i32
    %c0_i32_1 = arith.constant 0 : i32
    return %arg0, %c0_i32, %c0_i32_0 : i32, i32, i32
  }
  func.func @transform_1(%arg0: i32) -> (i32, i32) {
    %c0_i32 = arith.constant 0 : i32
    %c0_i32_0 = arith.constant 0 : i32
    %c0_i32_1 = arith.constant 0 : i32
    return %c0_i32, %c0_i32_0 : i32, i32
  }
  func.func @transform_2(%arg0: i32) -> (i32, i32) {
    %c0_i32 = arith.constant 0 : i32
    %c0_i32_0 = arith.constant 0 : i32
    %c0_i32_1 = arith.constant 0 : i32
    return %c0_i32, %c0_i32_0 : i32, i32
  }
  func.func @transform_3(%arg0: i32) -> (i32, i32) {
    %c0_i32 = arith.constant 0 : i32
    %c0_i32_0 = arith.constant 0 : i32
    %c0_i32_1 = arith.constant 0 : i32
    return %c0_i32, %c0_i32_0 : i32, i32
  }
  func.func @transform_4(%arg0: i32) -> (i32, i32) {
    %c0_i32 = arith.constant 0 : i32
    %c0_i32_0 = arith.constant 0 : i32
    %c0_i32_1 = arith.constant 0 : i32
    return %c0_i32, %c0_i32_0 : i32, i32
  }
  func.func @transform_5(%arg0: i32) -> (i32, i32, i32) {
    %c0_i32 = arith.constant 0 : i32
    %c0_i32_0 = arith.constant 0 : i32
    %c0_i32_1 = arith.constant 0 : i32
    return %arg0, %c0_i32, %c0_i32_0 : i32, i32, i32
  }
}

</mosaic_0001>

<llo_original>
// kernel: tpu_custom_call.1
$region0: #{tpu_custom_call.1}
  #allocation0 [shape = 'u32[]', space=smem, size = 0x4, offset = 0x4, fixed_abs, tag = 'smem constant byte address 0x4 - core index']
  #allocation1 [shape = 'u32[144,128]{1,0:T(1,128)}', space=vmem, size = 0x12000, scoped, tag = 'internal scratch']
  #allocation2 [shape = 'f32[2,2,32]{2,1,0:T(2,128)}', space=vmem, size = 0x800, scoped, tag = 'scratch operand']
  #allocation3 [shape = 'f32[2,2,32]{2,1,0:T(2,128)}', space=vmem, size = 0x800, scoped, tag = 'scratch operand']
  %s0 = inlined_call_operand.hbm [shape: f32[16,2,16], index: 0, kind: input, shape index: {}]
  %s1 = inlined_call_operand.hbm [shape: f32[48,128], index: 1, kind: input, shape index: {}]
  %s2 = inlined_call_operand.hbm [shape: f32[64,128], index: 2, kind: input, shape index: {}]
  %s3 = inlined_call_operand.vmem [shape: f32[1,128], index: 3, kind: input, shape index: {}]
  %s4 = inlined_call_operand.vmem [shape: f32[1,128], index: 4, kind: input, shape index: {}]
  %s5 = inlined_call_operand.hbm [shape: f32[16,2,32], index: 5, kind: output, shape index: {}]
  %s6 = sld [smem:[#allocation0]]
  $region69: #{tpu_custom_call.1} parent=0
    _
  %s8 = ssub.s32 1, %s6
  %s9 = scalar_select 0, %s8, %s6
  $region1: #{tpu_custom_call.1} parent=0
    #allocation4 [shape = 'u8[16384]{0}', space=vmem, size = 0x4000, scoped, tag = 'input window, operand 0']
    #allocation5 [shape = 's32[2]{0}', space=sflag, size = 0x8, scoped, tag = 'scoped memory for tpu_custom_call.1']
    #allocation6 [shape = 's32[2]{0}', space=sflag, size = 0x8, scoped, tag = 'scoped memory for tpu_custom_call.1']
    #allocation7 [shape = 'u8[24576]{0}', space=vmem, size = 0x6000, scoped, tag = 'input window, operand 1, single buffered']
    #allocation8 [shape = 's32[1]{0}', space=sflag, size = 0x4, scoped, tag = 'scoped memory for tpu_custom_call.1']
    #allocation9 [shape = 'u8[32768]{0}', space=vmem, size = 0x8000, scoped, tag = 'input window, operand 2, single buffered']
    #allocation10 [shape = 'u8[16384]{0}', space=vmem, size = 0x4000, scoped, tag = 'output window, operand 0']
    %10 = vsyncpa [#allocation5], 0
    %s11 = scalar_lea.sflag [#allocation5], 1
    %12 = vsyncpa %s11, 0
    %13 = vsyncpa [#allocation8], 0
    %14 = vsyncpa [#allocation6], 0
    %s15 = scalar_lea.sflag [#allocation6], 1
    %16 = vsyncpa %s15, 0
    loop: start=0, step=1, limit=4
    $region2: #{tpu_custom_call.1} parent=1 // loop_pre_header
      _
    $region3: #{tpu_custom_call.1} parent=1 // loop_header
      %s18 = sphi 0, %s22
      %p19 = scmp.ge.s32.totalorder %s18, 4
      %s28 = sphi 0, %s30
      %s31 = sphi 0, %s28
      %s32 = sphi 0, %s31
      %s48 = sphi 0, %s32
      %s52 = sphi 0, %s52
      %s54 = sphi 0, %s52
      %s55 = sphi 0, %s54
      %s69 = sphi 0, %s55
      %s73 = sphi 0, %s73
      %s75 = sphi 0, %s73
      %s76 = sphi 0, %s75
      %s90 = sphi 0, %s76
      %s94 = sphi 0, %s94
      %s96 = sphi 0, %s94
      %s97 = sphi 0, %s96
      %s111 = sphi 0, %s97
      %s115 = sphi 0, %s115
      %s117 = sphi 0, %s115
      %s118 = sphi 0, %s117
      %s132 = sphi 0, %s118
      %s138 = sphi 0, %s140
      %s141 = sphi 0, %s138
      %s142 = sphi 0, %s141
      %s158 = sphi 0, %s142
    $region4: #{tpu_custom_call.1} parent=1 // loop_header_branch
      %21 = sbr.rel (%p19) target = $region8
    $region5: #{tpu_custom_call.1} parent=1 // loop_body
      %s23 = ssub.s32 %s18, 1
      %s24 = ssub.s32 %s18, 2
      %s25 = sadd.s32 %s18, 1
      %s26 = ssub.s32 %s18, %s25
      %p27 = scmp.eq.s32.totalorder %s26, 0
      %s29 = sadd.s32 %s28, 1
      %s30 = scalar_select %p27, %s28, %s29
      %p33 = pneg %p27
      %p34 = scmp.eq.s32.totalorder %s18, 1
      %p35 = por %p33, %p34
      %p36 = scmp.ne.s32.totalorder %s28, %s31
      %p37 = scmp.eq.s32.totalorder %s18, 0
      %p38 = por %p36, %p37
      %p39 = scmp.ne.s32.totalorder %s28, %s31
      %p40 = scmp.eq.s32.totalorder %s23, 1
      %p41 = por %p39, %p40
      %p42 = scmp.ne.s32.totalorder %s31, %s32
      %p43 = scmp.eq.s32.totalorder %s23, 0
      %p44 = por %p42, %p43
      %p45 = scmp.ne.s32.totalorder %s31, %s32
      %p46 = scmp.eq.s32.totalorder %s24, 1
      %p47 = por %p45, %p46
      %p49 = scmp.ne.s32.totalorder %s32, %s48
      %p50 = scmp.eq.s32.totalorder %s24, 0
      %p51 = por %p49, %p50
      %s53 = sadd.s32 %s52, 1
      %p56 = scmp.eq.s32.totalorder %s18, 1
      %p57 = scmp.ne.s32.totalorder %s52, %s54
      %p58 = scmp.eq.s32.totalorder %s18, 0
      %p59 = por %p57, %p58
      %p60 = scmp.ne.s32.totalorder %s52, %s54
      %p61 = scmp.eq.s32.totalorder %s23, 1
      %p62 = por %p60, %p61
      %p63 = scmp.ne.s32.totalorder %s54, %s55
      %p64 = scmp.eq.s32.totalorder %s23, 0
      %p65 = por %p63, %p64
      %p66 = scmp.ne.s32.totalorder %s54, %s55
      %p67 = scmp.eq.s32.totalorder %s24, 1
      %p68 = por %p66, %p67
      %p70 = scmp.ne.s32.totalorder %s55, %s69
      %p71 = scmp.eq.s32.totalorder %s24, 0
      %p72 = por %p70, %p71
      %s74 = sadd.s32 %s73, 1
      %p77 = scmp.eq.s32.totalorder %s18, 1
      %p78 = scmp.ne.s32.totalorder %s73, %s75
      %p79 = scmp.eq.s32.totalorder %s18, 0
      %p80 = por %p78, %p79
      %p81 = scmp.ne.s32.totalorder %s73, %s75
      %p82 = scmp.eq.s32.totalorder %s23, 1
      %p83 = por %p81, %p82
      %p84 = scmp.ne.s32.totalorder %s75, %s76
      %p85 = scmp.eq.s32.totalorder %s23, 0
      %p86 = por %p84, %p85
      %p87 = scmp.ne.s32.totalorder %s75, %s76
      %p88 = scmp.eq.s32.totalorder %s24, 1
      %p89 = por %p87, %p88
      %p91 = scmp.ne.s32.totalorder %s76, %s90
      %p92 = scmp.eq.s32.totalorder %s24, 0
      %p93 = por %p91, %p92
      %s95 = sadd.s32 %s94, 1
      %p98 = scmp.eq.s32.totalorder %s18, 1
      %p99 = scmp.ne.s32.totalorder %s94, %s96
      %p100 = scmp.eq.s32.totalorder %s18, 0
      %p101 = por %p99, %p100
      %p102 = scmp.ne.s32.totalorder %s94, %s96
      %p103 = scmp.eq.s32.totalorder %s23, 1
      %p104 = por %p102, %p103
      %p105 = scmp.ne.s32.totalorder %s96, %s97
      %p106 = scmp.eq.s32.totalorder %s23, 0
      %p107 = por %p105, %p106
      %p108 = scmp.ne.s32.totalorder %s96, %s97
      %p109 = scmp.eq.s32.totalorder %s24, 1
      %p110 = por %p108, %p109
      %p112 = scmp.ne.s32.totalorder %s97, %s111
      %p113 = scmp.eq.s32.totalorder %s24, 0
      %p114 = por %p112, %p113
      %s116 = sadd.s32 %s115, 1
      %p119 = scmp.eq.s32.totalorder %s18, 1
      %p120 = scmp.ne.s32.totalorder %s115, %s117
      %p121 = scmp.eq.s32.totalorder %s18, 0
      %p122 = por %p120, %p121
      %p123 = scmp.ne.s32.totalorder %s115, %s117
      %p124 = scmp.eq.s32.totalorder %s23, 1
      %p125 = por %p123, %p124
      %p126 = scmp.ne.s32.totalorder %s117, %s118
      %p127 = scmp.eq.s32.totalorder %s23, 0
      %p128 = por %p126, %p127
      %p129 = scmp.ne.s32.totalorder %s117, %s118
      %p130 = scmp.eq.s32.totalorder %s24, 1
      %p131 = por %p129, %p130
      %p133 = scmp.ne.s32.totalorder %s118, %s132
      %p134 = scmp.eq.s32.totalorder %s24, 0
      %p135 = por %p133, %p134
      %s136 = ssub.s32 %s18, %s25
      %p137 = scmp.eq.s32.totalorder %s136, 0
      %s139 = sadd.s32 %s138, 1
      %s140 = scalar_select %p137, %s138, %s139
      %p143 = pneg %p137
      %p144 = scmp.eq.s32.totalorder %s18, 1
      %p145 = por %p143, %p144
      %p146 = scmp.ne.s32.totalorder %s138, %s141
      %p147 = scmp.eq.s32.totalorder %s18, 0
      %p148 = por %p146, %p147
      %p149 = scmp.ne.s32.totalorder %s138, %s141
      %p150 = scmp.eq.s32.totalorder %s23, 1
      %p151 = por %p149, %p150
      %p152 = scmp.ne.s32.totalorder %s141, %s142
      %p153 = scmp.eq.s32.totalorder %s23, 0
      %p154 = por %p152, %p153
      %p155 = scmp.ne.s32.totalorder %s141, %s142
      %p156 = scmp.eq.s32.totalorder %s24, 1
      %p157 = por %p155, %p156
      %p159 = scmp.ne.s32.totalorder %s142, %s158
      %p160 = scmp.eq.s32.totalorder %s24, 0
      %p161 = por %p159, %p160
      %p162 = scmp.le.s32.totalorder 1, %s18
      %p163 = scmp.lt.s32.totalorder %s18, 3
      %p164 = pnand %p162, %p163
      %p165 = pneg %p164
      // Predicated region
      $region9: #{tpu_custom_call.1} parent=5 // pred_check
        _
      $region10: #{tpu_custom_call.1} parent=5 // pred_check_branch
        %167 = sbr.rel (%p164) target = $region12
      $region11: #{tpu_custom_call.1} parent=5 // pred_region
        %s168 = ssub.s32 %s18, 1
        // Predicated region
        $region13: #{tpu_custom_call.1} parent=11 // pred_check
          %p169 = pneg %p65
        $region14: #{tpu_custom_call.1} parent=11 // pred_check_branch
          %171 = sbr.rel (%p169) target = $region16
        $region15: #{tpu_custom_call.1} parent=11 // pred_region
          %s173 = ssub.s32 768, 768
          %174 = vsyncadd [#allocation8], %s173
          %s175 = sshll.u32 [#allocation7], 4
          %s176 = int_to_ptr.vmem [resolvable:$true] %s175
          %181 = dma.hbm_to_vmem [thread:$0]  %s1, 768, %s176, [#allocation8], 128, 128, 8
        $region16: #{tpu_custom_call.1} parent=11 // pred_fallthru
          _
        // Predicated region
        $region17: #{tpu_custom_call.1} parent=11 // pred_check
          %p182 = pneg %p86
        $region18: #{tpu_custom_call.1} parent=11 // pred_check_branch
          %184 = sbr.rel (%p182) target = $region20
        $region19: #{tpu_custom_call.1} parent=11 // pred_region
          %s186 = ssub.s32 1024, 1024
          %187 = vsyncadd [#allocation8], %s186
          %s188 = sshll.u32 [#allocation9], 4
          %s189 = int_to_ptr.vmem [resolvable:$true] %s188
          %194 = dma.hbm_to_vmem [thread:$0]  %s2, 1024, %s189, [#allocation8], 128, 128, 8
        $region20: #{tpu_custom_call.1} parent=11 // pred_fallthru
          _
        // Predicated region
        $region21: #{tpu_custom_call.1} parent=11 // pred_check
          %p195 = pneg %p107
        $region22: #{tpu_custom_call.1} parent=11 // pred_check_branch
          %197 = sbr.rel (%p195) target = $region24
        $region23: #{tpu_custom_call.1} parent=11 // pred_region
          _
        $region24: #{tpu_custom_call.1} parent=11 // pred_fallthru
          _
        // Predicated region
        $region25: #{tpu_custom_call.1} parent=11 // pred_check
          %p198 = pneg %p128
        $region26: #{tpu_custom_call.1} parent=11 // pred_check_branch
          %200 = sbr.rel (%p198) target = $region28
        $region27: #{tpu_custom_call.1} parent=11 // pred_region
          _
        $region28: #{tpu_custom_call.1} parent=11 // pred_fallthru
          _
      $region12: #{tpu_custom_call.1} parent=5 // pred_fallthru
        _
      %p201 = scmp.lt.s32.totalorder %s18, 2
      // Predicated region
      $region29: #{tpu_custom_call.1} parent=5 // pred_check
        %p202 = pneg %p201
      $region30: #{tpu_custom_call.1} parent=5 // pred_check_branch
        %204 = sbr.rel (%p202) target = $region32
      $region31: #{tpu_custom_call.1} parent=5 // pred_region
        // Predicated region
        $region33: #{tpu_custom_call.1} parent=31 // pred_check
          %p205 = pneg %p38
        $region34: #{tpu_custom_call.1} parent=31 // pred_check_branch
          %207 = sbr.rel (%p205) target = $region36
        $region35: #{tpu_custom_call.1} parent=31 // pred_region
          %s208 = sand.u32 %s28, 1
          %s209 = scalar_lea.sflag [#allocation5], %s208
          %s210 = sand.u32 %s28, 1
          %s211 = smul.addr %s210, 16
          %s212 = scalar_lea.vmem [#allocation4], %s211
          %s213 = smul.u32 8, %s18
          %s215 = ssub.s32 256, 256
          %216 = vsyncadd %s209, %s215
          %s217 = smul.addr %s213, 32
          %s218 = scalar_lea.hbm %s0, %s217
          %s219 = sshll.u32 %s212, 4
          %s220 = int_to_ptr.vmem [resolvable:$true] %s219
          %225 = dma.hbm_to_vmem [thread:$0]  %s218, 256, %s220, %s209, 32, 32, 2
        $region36: #{tpu_custom_call.1} parent=31 // pred_fallthru
          _
      $region32: #{tpu_custom_call.1} parent=5 // pred_fallthru
        _
      %p226 = scmp.le.s32.totalorder 1, %s18
      %p227 = scmp.lt.s32.totalorder %s18, 3
      %p228 = pnand %p226, %p227
      %p229 = pneg %p228
      // Predicated region
      $region37: #{tpu_custom_call.1} parent=5 // pred_check
        _
      $region38: #{tpu_custom_call.1} parent=5 // pred_check_branch
        %231 = sbr.rel (%p228) target = $region40
      $region39: #{tpu_custom_call.1} parent=5 // pred_region
        %s232 = ssub.s32 %s18, 1
        %s233 = sand.u32 %s31, 1
        %s234 = scalar_lea.sflag [#allocation5], %s233
        %s235 = sand.u32 %s31, 1
        %s236 = smul.addr %s235, 16
        %s237 = scalar_lea.vmem [#allocation4], %s236
        // Predicated region
        $region41: #{tpu_custom_call.1} parent=39 // pred_check
          %p238 = pneg %p44
        $region42: #{tpu_custom_call.1} parent=39 // pred_check_branch
          %240 = sbr.rel (%p238) target = $region44
        $region43: #{tpu_custom_call.1} parent=39 // pred_region
          %241 = dma.done %s234, 256
        $region44: #{tpu_custom_call.1} parent=39 // pred_fallthru
          _
        // Predicated region
        $region45: #{tpu_custom_call.1} parent=39 // pred_check
          %p242 = pneg %p65
        $region46: #{tpu_custom_call.1} parent=39 // pred_check_branch
          %244 = sbr.rel (%p242) target = $region48
        $region47: #{tpu_custom_call.1} parent=39 // pred_region
          %245 = dma.done [#allocation8], 768
        $region48: #{tpu_custom_call.1} parent=39 // pred_fallthru
          _
        // Predicated region
        $region49: #{tpu_custom_call.1} parent=39 // pred_check
          %p246 = pneg %p86
        $region50: #{tpu_custom_call.1} parent=39 // pred_check_branch
          %248 = sbr.rel (%p246) target = $region52
        $region51: #{tpu_custom_call.1} parent=39 // pred_region
          %249 = dma.done [#allocation8], 1024
        $region52: #{tpu_custom_call.1} parent=39 // pred_fallthru
          _
        %s250 = sand.u32 %s31, 1
        %s251 = scalar_lea.sflag [#allocation5], %s250
        %s252 = sand.u32 %s31, 1
        %s253 = smul.addr %s252, 16
        %s254 = scalar_lea.vmem [#allocation4], %s253
        %p255 = pneg %p44
        %p256 = pneg %p41
        %p257 = pneg %p65
        %p258 = pneg %p62
        %p259 = pneg %p86
        %p260 = pneg %p83
        %p261 = pneg %p107
        %p262 = pneg %p104
        %p263 = pneg %p128
        %p264 = pneg %p125
        %p265 = pneg %p154
        %p266 = pneg %p151
        %s267 = sand.u32 %s141, 1
        %s268 = scalar_lea.sflag [#allocation6], %s267
        %s269 = sand.u32 %s141, 1
        %s270 = smul.addr %s269, 16
        %s271 = scalar_lea.vmem [#allocation10], %s270
        %s272 = smul.u32 8, %s23
        %s273 = smul.u32 8, %s23
        %p274 = scmp.eq.s32.totalorder %s23, 0
        // Predicated region
        $region53: #{tpu_custom_call.1} parent=39 // pred_check
          %p275 = pneg %p274
        $region54: #{tpu_custom_call.1} parent=39 // pred_check_branch
          %277 = sbr.rel (%p275) target = $region56
        $region55: #{tpu_custom_call.1} parent=39 // pred_region
          %vm278 = vcmask 254976
          %279 = vst.msk [vmem:[#allocation2] sm:$0x3] %vm278, 0.0
          %280 = vst.msk [vmem:[#allocation2 + $0x2] sm:$0x3] %vm278, 0.0
          %281 = vst.msk [vmem:[#allocation3] sm:$0x3] %vm278, 0.0
          %282 = vst.msk [vmem:[#allocation3 + $0x2] sm:$0x3] %vm278, 0.0
        $region56: #{tpu_custom_call.1} parent=39 // pred_fallthru
          _
        %v283 = vld [vmem:[#allocation7] sm:$0xff]
        %v284 = vld [vmem:[#allocation7 + $0x8] sm:$0xff]
        %v285 = vld [vmem:[#allocation7 + $0x10] sm:$0xff]
        %v286 = vld [vmem:[#allocation7 + $0x18] sm:$0xff]
        %v287 = vld [vmem:[#allocation7 + $0x20] sm:$0xff]
        %v288 = vld [vmem:[#allocation7 + $0x28] sm:$0xff]
        %v289 = vld [vmem:[#allocation9] sm:$0xff]
        %v290 = vld [vmem:[#allocation9 + $0x8] sm:$0xff]
        %v291 = vld [vmem:[#allocation9 + $0x10] sm:$0xff]
        %v292 = vld [vmem:[#allocation9 + $0x18] sm:$0xff]
        %v293 = vld [vmem:[#allocation9 + $0x20] sm:$0xff]
        %v294 = vld [vmem:[#allocation9 + $0x28] sm:$0xff]
        %v295 = vld [vmem:[#allocation9 + $0x30] sm:$0xff]
        %v296 = vld [vmem:[#allocation9 + $0x38] sm:$0xff]
        %v297 = vld [vmem:[%s3] sm:$0x1]
        %v298 = vld [vmem:[%s4] sm:$0x1]
        %v299 = vld [vmem:[#allocation2] sm:$0x3]
        %s300 = scalar_lea.vmem [#allocation2], 2
        %v301 = vld [vmem:[%s300] sm:$0x3]
        %v302 = vld [vmem:[#allocation3] sm:$0x3]
        %s303 = scalar_lea.vmem [#allocation3], 2
        %v304 = vld [vmem:[%s303] sm:$0x3]
        %v305 = vld [vmem:[%s237] sm:$0x3]
        %307 = vrot.lane.b32.xlu0 %v299, 16
        %v308 = vpop.permute.xlu0 %307
        %vm310 = vcmask 130048
        %v311 = vsel %vm310, %v305, %v308
        %v313 = vlaneseq
        %v314 = vshrl.u32 %v313, 7
        %v315 = vsub.s32 0, %v314
        %v316 = vrot.slane %v297, %v315
        %vm318 = vcmask 392192
        %v320 = vsel %vm318, %v311, 0
        %322 = vmatprep.subr.mxu0 0.0
        %323 = vmatpush1.msra.mxu0 0.0
        %324 = vmatprep.subr.mxu0 0.0
        %325 = vmatpush1.msra.mxu0 0.0
        %326 = vmatprep.subr.mxu0 0.0
        %327 = vmatpush1.msra.mxu0 0.0
        %328 = vmatprep.subr.mxu0 0.0
        %329 = vmatpush1.msra.mxu0 0.0
        %330 = vmatprep.subr.mxu0 0.0
        %331 = vmatpush1.msra.mxu0 0.0
        %332 = vmatprep.subr.mxu0 0.0
        %333 = vmatpush1.msra.mxu0 0.0
        %334 = vmatprep.subr.mxu0 0.0
        %335 = vmatpush1.msra.mxu0 0.0
        %336 = vmatprep.subr.mxu0 0.0
        %337 = vmatpush1.msra.mxu0 0.0
        %338 = vmatprep.subr.mxu0 0.0
        %339 = vmatpush1.msra.mxu0 0.0
        %340 = vmatprep.subr.mxu0 0.0
        %341 = vmatpush1.msra.mxu0 0.0
        %342 = vmatprep.subr.mxu0 0.0
        %343 = vmatpush1.msra.mxu0 %v288
        %344 = vmatprep.subr.mxu0 0.0
        %345 = vmatpush1.msra.mxu0 %v287
        %346 = vmatprep.subr.mxu0 0.0
        %347 = vmatpush1.msra.mxu0 %v286
        %348 = vmatprep.subr.mxu0 0.0
        %349 = vmatpush1.msra.mxu0 %v285
        %350 = vmatprep.subr.mxu0 0.0
        %351 = vmatpush1.msra.mxu0 %v284
        %352 = vmatprep.subr.mxu0 0.0
        %353 = vmatpush1.msra.mxu0 %v283
        %354 = vmatprep.subr.mxu0 0.0
        %355 = vmatpush2.msra.mxu0 0.0
        %356 = vmatprep.subr.mxu0 0.0
        %357 = vmatpush2.msra.mxu0 0.0
        %358 = vmatprep.subr.mxu0 0.0
        %359 = vmatpush2.msra.mxu0 0.0
        %360 = vmatprep.subr.mxu0 0.0
        %361 = vmatpush2.msra.mxu0 0.0
        %362 = vmatprep.subr.mxu0 0.0
        %363 = vmatpush2.msra.mxu0 0.0
        %364 = vmatprep.subr.mxu0 0.0
        %365 = vmatpush2.msra.mxu0 0.0
        %366 = vmatprep.subr.mxu0 0.0
        %367 = vmatpush2.msra.mxu0 0.0
        %368 = vmatprep.subr.mxu0 0.0
        %369 = vmatpush2.msra.mxu0 0.0
        %370 = vmatprep.subr.mxu0 0.0
        %371 = vmatpush2.msra.mxu0 0.0
        %372 = vmatprep.subr.mxu0 0.0
        %373 = vmatpush2.msra.mxu0 0.0
        %374 = vmatprep.subr.mxu0 0.0
        %375 = vmatpush2.msra.mxu0 0.0
        %376 = vmatprep.subr.mxu0 0.0
        %377 = vmatpush2.msra.mxu0 0.0
        %378 = vmatprep.subr.mxu0 0.0
        %379 = vmatpush2.msra.mxu0 0.0
        %380 = vmatprep.subr.mxu0 0.0
        %381 = vmatpush2.msra.mxu0 0.0
        %382 = vmatprep.subr.mxu0 0.0
        %383 = vmatpush2.msra.mxu0 0.0
        %384 = vmatprep.subr.mxu0 0.0
        %385 = vmatpush2.msra.mxu0 0.0
        %386 = vmatprep.mubr.f32.mxu0 0.0
        %387 = vmatmul.mubr.f32.gmra.mxu0 %v320
        %v388 = vpop.f32.mrf.mxu0
        %v389 = vadd.f32 %v316, %v388
        %v390 = vpop.f32.mrf.mxu0
        %391 = vdwg.mxu0
        %v392 = vxor.u32 %v389, 2147483648
        %v393 = vmul.f32 %v392, 1.442695
        %v394 = vpow.pop %v393
        %v395 = vadd.f32 %v394, 1.0
        %v396 = vrcp.pop %v395
        %v397 = vmul.f32 1.0, %v396
        %v398 = vtanh.pop %v389
        %400 = vrot.lane.b32.xlu0 %v302, 32
        %v401 = vpop.permute.xlu0 %400
        %v403 = vmul.f32 %v397, %v401
        %405 = vrot.lane.b32.xlu0 %v398, 32
        %v406 = vpop.permute.xlu0 %405
        %v408 = vmul.f32 %v397, %v406
        %410 = vrot.lane.b32.xlu0 %v408, 32
        %v411 = vpop.permute.xlu0 %410
        %v413 = vadd.f32 %v403, %v411
        %v414 = vtanh.pop %v413
        %416 = vrot.lane.b32.xlu0 %v414, 32
        %v417 = vpop.permute.xlu0 %416
        %v419 = vmul.f32 %v397, %v417
        %421 = vrot.lane.b32.xlu0 %v419, 64
        %v422 = vpop.permute.xlu0 %421
        %425 = vrot.lane.b32.xlu0 %v301, 32
        %v426 = vpop.permute.xlu0 %425
        %vm428 = vcmask 261120
        %v429 = vsel %vm428, %v422, %v426
        %v431 = vlaneseq
        %v432 = vshrl.u32 %v431, 7
        %v433 = vsub.s32 0, %v432
        %v434 = vrot.slane %v298, %v433
        %vm436 = vcmask 523264
        %v438 = vsel %vm436, %v429, 0
        %440 = vmatprep.subr.mxu0 0.0
        %441 = vmatpush1.msra.mxu0 0.0
        %442 = vmatprep.subr.mxu0 0.0
        %443 = vmatpush1.msra.mxu0 0.0
        %444 = vmatprep.subr.mxu0 0.0
        %445 = vmatpush1.msra.mxu0 0.0
        %446 = vmatprep.subr.mxu0 0.0
        %447 = vmatpush1.msra.mxu0 0.0
        %448 = vmatprep.subr.mxu0 0.0
        %449 = vmatpush1.msra.mxu0 0.0
        %450 = vmatprep.subr.mxu0 0.0
        %451 = vmatpush1.msra.mxu0 0.0
        %452 = vmatprep.subr.mxu0 0.0
        %453 = vmatpush1.msra.mxu0 0.0
        %454 = vmatprep.subr.mxu0 0.0
        %455 = vmatpush1.msra.mxu0 0.0
        %456 = vmatprep.subr.mxu0 0.0
        %457 = vmatpush1.msra.mxu0 %v296
        %458 = vmatprep.subr.mxu0 0.0
        %459 = vmatpush1.msra.mxu0 %v295
        %460 = vmatprep.subr.mxu0 0.0
        %461 = vmatpush1.msra.mxu0 %v294
        %462 = vmatprep.subr.mxu0 0.0
        %463 = vmatpush1.msra.mxu0 %v293
        %464 = vmatprep.subr.mxu0 0.0
        %465 = vmatpush1.msra.mxu0 %v292
        %466 = vmatprep.subr.mxu0 0.0
        %467 = vmatpush1.msra.mxu0 %v291
        %468 = vmatprep.subr.mxu0 0.0
        %469 = vmatpush1.msra.mxu0 %v290
        %470 = vmatprep.subr.mxu0 0.0
        %471 = vmatpush1.msra.mxu0 %v289
        %472 = vmatprep.subr.mxu0 0.0
        %473 = vmatpush2.msra.mxu0 0.0
        %474 = vmatprep.subr.mxu0 0.0
        %475 = vmatpush2.msra.mxu0 0.0
        %476 = vmatprep.subr.mxu0 0.0
        %477 = vmatpush2.msra.mxu0 0.0
        %478 = vmatprep.subr.mxu0 0.0
        %479 = vmatpush2.msra.mxu0 0.0
        %480 = vmatprep.subr.mxu0 0.0
        %481 = vmatpush2.msra.mxu0 0.0
        %482 = vmatprep.subr.mxu0 0.0
        %483 = vmatpush2.msra.mxu0 0.0
        %484 = vmatprep.subr.mxu0 0.0
        %485 = vmatpush2.msra.mxu0 0.0
        %486 = vmatprep.subr.mxu0 0.0
        %487 = vmatpush2.msra.mxu0 0.0
        %488 = vmatprep.subr.mxu0 0.0
        %489 = vmatpush2.msra.mxu0 0.0
        %490 = vmatprep.subr.mxu0 0.0
        %491 = vmatpush2.msra.mxu0 0.0
        %492 = vmatprep.subr.mxu0 0.0
        %493 = vmatpush2.msra.mxu0 0.0
        %494 = vmatprep.subr.mxu0 0.0
        %495 = vmatpush2.msra.mxu0 0.0
        %496 = vmatprep.subr.mxu0 0.0
        %497 = vmatpush2.msra.mxu0 0.0
        %498 = vmatprep.subr.mxu0 0.0
        %499 = vmatpush2.msra.mxu0 0.0
        %500 = vmatprep.subr.mxu0 0.0
        %501 = vmatpush2.msra.mxu0 0.0
        %502 = vmatprep.subr.mxu0 0.0
        %503 = vmatpush2.msra.mxu0 0.0
        %504 = vmatprep.mubr.f32.mxu0 0.0
        %505 = vmatmul.mubr.f32.gmra.mxu0 %v438
        %v506 = vpop.f32.mrf.mxu0
        %v507 = vadd.f32 %v434, %v506
        %v508 = vpop.f32.mrf.mxu0
        %509 = vdwg.mxu0
        %v510 = vxor.u32 %v507, 2147483648
        %v511 = vmul.f32 %v510, 1.442695
        %v512 = vpow.pop %v511
        %v513 = vadd.f32 %v512, 1.0
        %v514 = vrcp.pop %v513
        %v515 = vmul.f32 1.0, %v514
        %v516 = vtanh.pop %v507
        %518 = vrot.lane.b32.xlu0 %v304, 32
        %v519 = vpop.permute.xlu0 %518
        %v521 = vmul.f32 %v515, %v519
        %523 = vrot.lane.b32.xlu0 %v516, 32
        %v524 = vpop.permute.xlu0 %523
        %v526 = vmul.f32 %v515, %v524
        %528 = vrot.lane.b32.xlu0 %v526, 32
        %v529 = vpop.permute.xlu0 %528
        %v531 = vadd.f32 %v521, %v529
        %v532 = vtanh.pop %v531
        %534 = vrot.lane.b32.xlu0 %v532, 32
        %v535 = vpop.permute.xlu0 %534
        %v537 = vmul.f32 %v515, %v535
        %539 = vrot.lane.b32.xlu0 %v537, 64
        %v540 = vpop.permute.xlu0 %539
        %vm542 = vcmask 254976
        %543 = vst.msk [vmem:[%s271] sm:$0x3] %vm542, %v540
        %s544 = scalar_lea.vmem %s237, 2 [#allocation4]
        %v545 = vld [vmem:[%s544] sm:$0x3]
        %546 = vrot.lane.b32.xlu0 %v419, 80
        %v547 = vpop.permute.xlu0 %546
        %v549 = vsel %vm310, %v545, %v547
        %v551 = vsel %vm318, %v549, 0
        %553 = vmatprep.subr.mxu0 0.0
        %554 = vmatpush1.msra.mxu0 0.0
        %555 = vmatprep.subr.mxu0 0.0
        %556 = vmatpush1.msra.mxu0 0.0
        %557 = vmatprep.subr.mxu0 0.0
        %558 = vmatpush1.msra.mxu0 0.0
        %559 = vmatprep.subr.mxu0 0.0
        %560 = vmatpush1.msra.mxu0 0.0
        %561 = vmatprep.subr.mxu0 0.0
        %562 = vmatpush1.msra.mxu0 0.0
        %563 = vmatprep.subr.mxu0 0.0
        %564 = vmatpush1.msra.mxu0 0.0
        %565 = vmatprep.subr.mxu0 0.0
        %566 = vmatpush1.msra.mxu0 0.0
        %567 = vmatprep.subr.mxu0 0.0
        %568 = vmatpush1.msra.mxu0 0.0
        %569 = vmatprep.subr.mxu0 0.0
        %570 = vmatpush1.msra.mxu0 0.0
        %571 = vmatprep.subr.mxu0 0.0
        %572 = vmatpush1.msra.mxu0 0.0
        %573 = vmatprep.subr.mxu0 0.0
        %574 = vmatpush1.msra.mxu0 %v288
        %575 = vmatprep.subr.mxu0 0.0
        %576 = vmatpush1.msra.mxu0 %v287
        %577 = vmatprep.subr.mxu0 0.0
        %578 = vmatpush1.msra.mxu0 %v286
        %579 = vmatprep.subr.mxu0 0.0
        %580 = vmatpush1.msra.mxu0 %v285
        %581 = vmatprep.subr.mxu0 0.0
        %582 = vmatpush1.msra.mxu0 %v284
        %583 = vmatprep.subr.mxu0 0.0
        %584 = vmatpush1.msra.mxu0 %v283
        %585 = vmatprep.subr.mxu0 0.0
        %586 = vmatpush2.msra.mxu0 0.0
        %587 = vmatprep.subr.mxu0 0.0
        %588 = vmatpush2.msra.mxu0 0.0
        %589 = vmatprep.subr.mxu0 0.0
        %590 = vmatpush2.msra.mxu0 0.0
        %591 = vmatprep.subr.mxu0 0.0
        %592 = vmatpush2.msra.mxu0 0.0
        %593 = vmatprep.subr.mxu0 0.0
        %594 = vmatpush2.msra.mxu0 0.0
        %595 = vmatprep.subr.mxu0 0.0
        %596 = vmatpush2.msra.mxu0 0.0
        %597 = vmatprep.subr.mxu0 0.0
        %598 = vmatpush2.msra.mxu0 0.0
        %599 = vmatprep.subr.mxu0 0.0
        %600 = vmatpush2.msra.mxu0 0.0
        %601 = vmatprep.subr.mxu0 0.0
        %602 = vmatpush2.msra.mxu0 0.0
        %603 = vmatprep.subr.mxu0 0.0
        %604 = vmatpush2.msra.mxu0 0.0
        %605 = vmatprep.subr.mxu0 0.0
        %606 = vmatpush2.msra.mxu0 0.0
        %607 = vmatprep.subr.mxu0 0.0
        %608 = vmatpush2.msra.mxu0 0.0
        %609 = vmatprep.subr.mxu0 0.0
        %610 = vmatpush2.msra.mxu0 0.0
        %611 = vmatprep.subr.mxu0 0.0
        %612 = vmatpush2.msra.mxu0 0.0
        %613 = vmatprep.subr.mxu0 0.0
        %614 = vmatpush2.msra.mxu0 0.0
        %615 = vmatprep.subr.mxu0 0.0
        %616 = vmatpush2.msra.mxu0 0.0
        %617 = vmatprep.mubr.f32.mxu0 0.0
        %618 = vmatmul.mubr.f32.gmra.mxu0 %v551
        %v619 = vpop.f32.mrf.mxu0
        %v620 = vadd.f32 %v316, %v619
        %v621 = vpop.f32.mrf.mxu0
        %622 = vdwg.mxu0
        %v623 = vxor.u32 %v620, 2147483648
        %v624 = vmul.f32 %v623, 1.442695
        %v625 = vpow.pop %v624
        %v626 = vadd.f32 %v625, 1.0
        %v627 = vrcp.pop %v626
        %v628 = vmul.f32 1.0, %v627
        %v629 = vtanh.pop %v620
        %v630 = vmul.f32 %v628, %v413
        %632 = vrot.lane.b32.xlu0 %v629, 32
        %v633 = vpop.permute.xlu0 %632
        %v635 = vmul.f32 %v628, %v633
        %637 = vrot.lane.b32.xlu0 %v635, 32
        %v638 = vpop.permute.xlu0 %637
        %v640 = vadd.f32 %v630, %v638
        %v641 = vtanh.pop %v640
        %643 = vrot.lane.b32.xlu0 %v641, 32
        %v644 = vpop.permute.xlu0 %643
        %v646 = vmul.f32 %v628, %v644
        %648 = vrot.lane.b32.xlu0 %v646, 64
        %v649 = vpop.permute.xlu0 %648
        %651 = vrot.lane.b32.xlu0 %v537, 96
        %v652 = vpop.permute.xlu0 %651
        %v654 = vsel %vm428, %v649, %v652
        %v656 = vsel %vm436, %v654, 0
        %658 = vmatprep.subr.mxu0 0.0
        %659 = vmatpush1.msra.mxu0 0.0
        %660 = vmatprep.subr.mxu0 0.0
        %661 = vmatpush1.msra.mxu0 0.0
        %662 = vmatprep.subr.mxu0 0.0
        %663 = vmatpush1.msra.mxu0 0.0
        %664 = vmatprep.subr.mxu0 0.0
        %665 = vmatpush1.msra.mxu0 0.0
        %666 = vmatprep.subr.mxu0 0.0
        %667 = vmatpush1.msra.mxu0 0.0
        %668 = vmatprep.subr.mxu0 0.0
        %669 = vmatpush1.msra.mxu0 0.0
        %670 = vmatprep.subr.mxu0 0.0
        %671 = vmatpush1.msra.mxu0 0.0
        %672 = vmatprep.subr.mxu0 0.0
        %673 = vmatpush1.msra.mxu0 0.0
        %674 = vmatprep.subr.mxu0 0.0
        %675 = vmatpush1.msra.mxu0 %v296
        %676 = vmatprep.subr.mxu0 0.0
        %677 = vmatpush1.msra.mxu0 %v295
        %678 = vmatprep.subr.mxu0 0.0
        %679 = vmatpush1.msra.mxu0 %v294
        %680 = vmatprep.subr.mxu0 0.0
        %681 = vmatpush1.msra.mxu0 %v293
        %682 = vmatprep.subr.mxu0 0.0
        %683 = vmatpush1.msra.mxu0 %v292
        %684 = vmatprep.subr.mxu0 0.0
        %685 = vmatpush1.msra.mxu0 %v291
        %686 = vmatprep.subr.mxu0 0.0
        %687 = vmatpush1.msra.mxu0 %v290
        %688 = vmatprep.subr.mxu0 0.0
        %689 = vmatpush1.msra.mxu0 %v289
        %690 = vmatprep.subr.mxu0 0.0
        %691 = vmatpush2.msra.mxu0 0.0
        %692 = vmatprep.subr.mxu0 0.0
        %693 = vmatpush2.msra.mxu0 0.0
        %694 = vmatprep.subr.mxu0 0.0
        %695 = vmatpush2.msra.mxu0 0.0
        %696 = vmatprep.subr.mxu0 0.0
        %697 = vmatpush2.msra.mxu0 0.0
        %698 = vmatprep.subr.mxu0 0.0
        %699 = vmatpush2.msra.mxu0 0.0
        %700 = vmatprep.subr.mxu0 0.0
        %701 = vmatpush2.msra.mxu0 0.0
        %702 = vmatprep.subr.mxu0 0.0
        %703 = vmatpush2.msra.mxu0 0.0
        %704 = vmatprep.subr.mxu0 0.0
        %705 = vmatpush2.msra.mxu0 0.0
        %706 = vmatprep.subr.mxu0 0.0
        %707 = vmatpush2.msra.mxu0 0.0
        %708 = vmatprep.subr.mxu0 0.0
        %709 = vmatpush2.msra.mxu0 0.0
        %710 = vmatprep.subr.mxu0 0.0
        %711 = vmatpush2.msra.mxu0 0.0
        %712 = vmatprep.subr.mxu0 0.0
        %713 = vmatpush2.msra.mxu0 0.0
        %714 = vmatprep.subr.mxu0 0.0
        %715 = vmatpush2.msra.mxu0 0.0
        %716 = vmatprep.subr.mxu0 0.0
        %717 = vmatpush2.msra.mxu0 0.0
        %718 = vmatprep.subr.mxu0 0.0
        %719 = vmatpush2.msra.mxu0 0.0
        %720 = vmatprep.subr.mxu0 0.0
        %721 = vmatpush2.msra.mxu0 0.0
        %722 = vmatprep.mubr.f32.mxu0 0.0
        %723 = vmatmul.mubr.f32.gmra.mxu0 %v656
        %v724 = vpop.f32.mrf.mxu0
        %v725 = vadd.f32 %v434, %v724
        %v726 = vpop.f32.mrf.mxu0
        %727 = vdwg.mxu0
        %v728 = vxor.u32 %v725, 2147483648
        %v729 = vmul.f32 %v728, 1.442695
        %v730 = vpow.pop %v729
        %v731 = vadd.f32 %v730, 1.0
        %v732 = vrcp.pop %v731
        %v733 = vmul.f32 1.0, %v732
        %v734 = vtanh.pop %v725
        %v735 = vmul.f32 %v733, %v531
        %737 = vrot.lane.b32.xlu0 %v734, 32
        %v738 = vpop.permute.xlu0 %737
        %v740 = vmul.f32 %v733, %v738
        %742 = vrot.lane.b32.xlu0 %v740, 32
        %v743 = vpop.permute.xlu0 %742
        %v745 = vadd.f32 %v735, %v743
        %v746 = vtanh.pop %v745
        %748 = vrot.lane.b32.xlu0 %v746, 32
        %v749 = vpop.permute.xlu0 %748
        %v751 = vmul.f32 %v733, %v749
        %753 = vrot.lane.b32.xlu0 %v751, 64
        %v754 = vpop.permute.xlu0 %753
        %s756 = scalar_lea.vmem %s271, 2 [#allocation10]
        %757 = vst.msk [vmem:[%s756] sm:$0x3] %vm542, %v754
        %s758 = scalar_lea.vmem %s237, 4 [#allocation4]
        %v759 = vld [vmem:[%s758] sm:$0x3]
        %760 = vrot.lane.b32.xlu0 %v646, 80
        %v761 = vpop.permute.xlu0 %760
        %v763 = vsel %vm310, %v759, %v761
        %v765 = vsel %vm318, %v763, 0
        %767 = vmatprep.subr.mxu0 0.0
        %768 = vmatpush1.msra.mxu0 0.0
        %769 = vmatprep.subr.mxu0 0.0
        %770 = vmatpush1.msra.mxu0 0.0
        %771 = vmatprep.subr.mxu0 0.0
        %772 = vmatpush1.msra.mxu0 0.0
        %773 = vmatprep.subr.mxu0 0.0
        %774 = vmatpush1.msra.mxu0 0.0
        %775 = vmatprep.subr.mxu0 0.0
        %776 = vmatpush1.msra.mxu0 0.0
        %777 = vmatprep.subr.mxu0 0.0
        %778 = vmatpush1.msra.mxu0 0.0
        %779 = vmatprep.subr.mxu0 0.0
        %780 = vmatpush1.msra.mxu0 0.0
        %781 = vmatprep.subr.mxu0 0.0
        %782 = vmatpush1.msra.mxu0 0.0
        %783 = vmatprep.subr.mxu0 0.0
        %784 = vmatpush1.msra.mxu0 0.0
        %785 = vmatprep.subr.mxu0 0.0
        %786 = vmatpush1.msra.mxu0 0.0
        %787 = vmatprep.subr.mxu0 0.0
        %788 = vmatpush1.msra.mxu0 %v288
        %789 = vmatprep.subr.mxu0 0.0
        %790 = vmatpush1.msra.mxu0 %v287
        %791 = vmatprep.subr.mxu0 0.0
        %792 = vmatpush1.msra.mxu0 %v286
        %793 = vmatprep.subr.mxu0 0.0
        %794 = vmatpush1.msra.mxu0 %v285
        %795 = vmatprep.subr.mxu0 0.0
        %796 = vmatpush1.msra.mxu0 %v284
        %797 = vmatprep.subr.mxu0 0.0
        %798 = vmatpush1.msra.mxu0 %v283
        %799 = vmatprep.subr.mxu0 0.0
        %800 = vmatpush2.msra.mxu0 0.0
        %801 = vmatprep.subr.mxu0 0.0
        %802 = vmatpush2.msra.mxu0 0.0
        %803 = vmatprep.subr.mxu0 0.0
        %804 = vmatpush2.msra.mxu0 0.0
        %805 = vmatprep.subr.mxu0 0.0
        %806 = vmatpush2.msra.mxu0 0.0
        %807 = vmatprep.subr.mxu0 0.0
        %808 = vmatpush2.msra.mxu0 0.0
        %809 = vmatprep.subr.mxu0 0.0
        %810 = vmatpush2.msra.mxu0 0.0
        %811 = vmatprep.subr.mxu0 0.0
        %812 = vmatpush2.msra.mxu0 0.0
        %813 = vmatprep.subr.mxu0 0.0
        %814 = vmatpush2.msra.mxu0 0.0
        %815 = vmatprep.subr.mxu0 0.0
        %816 = vmatpush2.msra.mxu0 0.0
        %817 = vmatprep.subr.mxu0 0.0
        %818 = vmatpush2.msra.mxu0 0.0
        %819 = vmatprep.subr.mxu0 0.0
        %820 = vmatpush2.msra.mxu0 0.0
        %821 = vmatprep.subr.mxu0 0.0
        %822 = vmatpush2.msra.mxu0 0.0
        %823 = vmatprep.subr.mxu0 0.0
        %824 = vmatpush2.msra.mxu0 0.0
        %825 = vmatprep.subr.mxu0 0.0
        %826 = vmatpush2.msra.mxu0 0.0
        %827 = vmatprep.subr.mxu0 0.0
        %828 = vmatpush2.msra.mxu0 0.0
        %829 = vmatprep.subr.mxu0 0.0
        %830 = vmatpush2.msra.mxu0 0.0
        %831 = vmatprep.mubr.f32.mxu0 0.0
        %832 = vmatmul.mubr.f32.gmra.mxu0 %v765
        %v833 = vpop.f32.mrf.mxu0
        %v834 = vadd.f32 %v316, %v833
        %v835 = vpop.f32.mrf.mxu0
        %836 = vdwg.mxu0
        %v837 = vxor.u32 %v834, 2147483648
        %v838 = vmul.f32 %v837, 1.442695
        %v839 = vpow.pop %v838
        %v840 = vadd.f32 %v839, 1.0
        %v841 = vrcp.pop %v840
        %v842 = vmul.f32 1.0, %v841
        %v843 = vtanh.pop %v834
        %v844 = vmul.f32 %v842, %v640
        %846 = vrot.lane.b32.xlu0 %v843, 32
        %v847 = vpop.permute.xlu0 %846
        %v849 = vmul.f32 %v842, %v847
        %851 = vrot.lane.b32.xlu0 %v849, 32
        %v852 = vpop.permute.xlu0 %851
        %v854 = vadd.f32 %v844, %v852
        %v855 = vtanh.pop %v854
        %857 = vrot.lane.b32.xlu0 %v855, 32
        %v858 = vpop.permute.xlu0 %857
        %v860 = vmul.f32 %v842, %v858
        %862 = vrot.lane.b32.xlu0 %v860, 64
        %v863 = vpop.permute.xlu0 %862
        %865 = vrot.lane.b32.xlu0 %v751, 96
        %v866 = vpop.permute.xlu0 %865
        %v868 = vsel %vm428, %v863, %v866
        %v870 = vsel %vm436, %v868, 0
        %872 = vmatprep.subr.mxu0 0.0
        %873 = vmatpush1.msra.mxu0 0.0
        %874 = vmatprep.subr.mxu0 0.0
        %875 = vmatpush1.msra.mxu0 0.0
        %876 = vmatprep.subr.mxu0 0.0
        %877 = vmatpush1.msra.mxu0 0.0
        %878 = vmatprep.subr.mxu0 0.0
        %879 = vmatpush1.msra.mxu0 0.0
        %880 = vmatprep.subr.mxu0 0.0
        %881 = vmatpush1.msra.mxu0 0.0
        %882 = vmatprep.subr.mxu0 0.0
        %883 = vmatpush1.msra.mxu0 0.0
        %884 = vmatprep.subr.mxu0 0.0
        %885 = vmatpush1.msra.mxu0 0.0
        %886 = vmatprep.subr.mxu0 0.0
        %887 = vmatpush1.msra.mxu0 0.0
        %888 = vmatprep.subr.mxu0 0.0
        %889 = vmatpush1.msra.mxu0 %v296
        %890 = vmatprep.subr.mxu0 0.0
        %891 = vmatpush1.msra.mxu0 %v295
        %892 = vmatprep.subr.mxu0 0.0
        %893 = vmatpush1.msra.mxu0 %v294
        %894 = vmatprep.subr.mxu0 0.0
        %895 = vmatpush1.msra.mxu0 %v293
        %896 = vmatprep.subr.mxu0 0.0
        %897 = vmatpush1.msra.mxu0 %v292
        %898 = vmatprep.subr.mxu0 0.0
        %899 = vmatpush1.msra.mxu0 %v291
        %900 = vmatprep.subr.mxu0 0.0
        %901 = vmatpush1.msra.mxu0 %v290
        %902 = vmatprep.subr.mxu0 0.0
        %903 = vmatpush1.msra.mxu0 %v289
        %904 = vmatprep.subr.mxu0 0.0
        %905 = vmatpush2.msra.mxu0 0.0
        %906 = vmatprep.subr.mxu0 0.0
        %907 = vmatpush2.msra.mxu0 0.0
        %908 = vmatprep.subr.mxu0 0.0
        %909 = vmatpush2.msra.mxu0 0.0
        %910 = vmatprep.subr.mxu0 0.0
        %911 = vmatpush2.msra.mxu0 0.0
        %912 = vmatprep.subr.mxu0 0.0
        %913 = vmatpush2.msra.mxu0 0.0
        %914 = vmatprep.subr.mxu0 0.0
        %915 = vmatpush2.msra.mxu0 0.0
        %916 = vmatprep.subr.mxu0 0.0
        %917 = vmatpush2.msra.mxu0 0.0
        %918 = vmatprep.subr.mxu0 0.0
        %919 = vmatpush2.msra.mxu0 0.0
        %920 = vmatprep.subr.mxu0 0.0
        %921 = vmatpush2.msra.mxu0 0.0
        %922 = vmatprep.subr.mxu0 0.0
        %923 = vmatpush2.msra.mxu0 0.0
        %924 = vmatprep.subr.mxu0 0.0
        %925 = vmatpush2.msra.mxu0 0.0
        %926 = vmatprep.subr.mxu0 0.0
        %927 = vmatpush2.msra.mxu0 0.0
        %928 = vmatprep.subr.mxu0 0.0
        %929 = vmatpush2.msra.mxu0 0.0
        %930 = vmatprep.subr.mxu0 0.0
        %931 = vmatpush2.msra.mxu0 0.0
        %932 = vmatprep.subr.mxu0 0.0
        %933 = vmatpush2.msra.mxu0 0.0
        %934 = vmatprep.subr.mxu0 0.0
        %935 = vmatpush2.msra.mxu0 0.0
        %936 = vmatprep.mubr.f32.mxu0 0.0
        %937 = vmatmul.mubr.f32.gmra.mxu0 %v870
        %v938 = vpop.f32.mrf.mxu0
        %v939 = vadd.f32 %v434, %v938
        %v940 = vpop.f32.mrf.mxu0
        %941 = vdwg.mxu0
        %v942 = vxor.u32 %v939, 2147483648
        %v943 = vmul.f32 %v942, 1.442695
        %v944 = vpow.pop %v943
        %v945 = vadd.f32 %v944, 1.0
        %v946 = vrcp.pop %v945
        %v947 = vmul.f32 1.0, %v946
        %v948 = vtanh.pop %v939
        %v949 = vmul.f32 %v947, %v745
        %951 = vrot.lane.b32.xlu0 %v948, 32
        %v952 = vpop.permute.xlu0 %951
        %v954 = vmul.f32 %v947, %v952
        %956 = vrot.lane.b32.xlu0 %v954, 32
        %v957 = vpop.permute.xlu0 %956
        %v959 = vadd.f32 %v949, %v957
        %v960 = vtanh.pop %v959
        %962 = vrot.lane.b32.xlu0 %v960, 32
        %v963 = vpop.permute.xlu0 %962
        %v965 = vmul.f32 %v947, %v963
        %967 = vrot.lane.b32.xlu0 %v965, 64
        %v968 = vpop.permute.xlu0 %967
        %s970 = scalar_lea.vmem %s271, 4 [#allocation10]
        %971 = vst.msk [vmem:[%s970] sm:$0x3] %vm542, %v968
        %s972 = scalar_lea.vmem %s237, 6 [#allocation4]
        %v973 = vld [vmem:[%s972] sm:$0x3]
        %974 = vrot.lane.b32.xlu0 %v860, 80
        %v975 = vpop.permute.xlu0 %974
        %v977 = vsel %vm310, %v973, %v975
        %v979 = vsel %vm318, %v977, 0
        %981 = vmatprep.subr.mxu0 0.0
        %982 = vmatpush1.msra.mxu0 0.0
        %983 = vmatprep.subr.mxu0 0.0
        %984 = vmatpush1.msra.mxu0 0.0
        %985 = vmatprep.subr.mxu0 0.0
        %986 = vmatpush1.msra.mxu0 0.0
        %987 = vmatprep.subr.mxu0 0.0
        %988 = vmatpush1.msra.mxu0 0.0
        %989 = vmatprep.subr.mxu0 0.0
        %990 = vmatpush1.msra.mxu0 0.0
        %991 = vmatprep.subr.mxu0 0.0
        %992 = vmatpush1.msra.mxu0 0.0
        %993 = vmatprep.subr.mxu0 0.0
        %994 = vmatpush1.msra.mxu0 0.0
        %995 = vmatprep.subr.mxu0 0.0
        %996 = vmatpush1.msra.mxu0 0.0
        %997 = vmatprep.subr.mxu0 0.0
        %998 = vmatpush1.msra.mxu0 0.0
        %999 = vmatprep.subr.mxu0 0.0
        %1000 = vmatpush1.msra.mxu0 0.0
        %1001 = vmatprep.subr.mxu0 0.0
        %1002 = vmatpush1.msra.mxu0 %v288
        %1003 = vmatprep.subr.mxu0 0.0
        %1004 = vmatpush1.msra.mxu0 %v287
        %1005 = vmatprep.subr.mxu0 0.0
        %1006 = vmatpush1.msra.mxu0 %v286
        %1007 = vmatprep.subr.mxu0 0.0
        %1008 = vmatpush1.msra.mxu0 %v285
        %1009 = vmatprep.subr.mxu0 0.0
        %1010 = vmatpush1.msra.mxu0 %v284
        %1011 = vmatprep.subr.mxu0 0.0
        %1012 = vmatpush1.msra.mxu0 %v283
        %1013 = vmatprep.subr.mxu0 0.0
        %1014 = vmatpush2.msra.mxu0 0.0
        %1015 = vmatprep.subr.mxu0 0.0
        %1016 = vmatpush2.msra.mxu0 0.0
        %1017 = vmatprep.subr.mxu0 0.0
        %1018 = vmatpush2.msra.mxu0 0.0
        %1019 = vmatprep.subr.mxu0 0.0
        %1020 = vmatpush2.msra.mxu0 0.0
        %1021 = vmatprep.subr.mxu0 0.0
        %1022 = vmatpush2.msra.mxu0 0.0
        %1023 = vmatprep.subr.mxu0 0.0
        %1024 = vmatpush2.msra.mxu0 0.0
        %1025 = vmatprep.subr.mxu0 0.0
        %1026 = vmatpush2.msra.mxu0 0.0
        %1027 = vmatprep.subr.mxu0 0.0
        %1028 = vmatpush2.msra.mxu0 0.0
        %1029 = vmatprep.subr.mxu0 0.0
        %1030 = vmatpush2.msra.mxu0 0.0
        %1031 = vmatprep.subr.mxu0 0.0
        %1032 = vmatpush2.msra.mxu0 0.0
        %1033 = vmatprep.subr.mxu0 0.0
        %1034 = vmatpush2.msra.mxu0 0.0
        %1035 = vmatprep.subr.mxu0 0.0
        %1036 = vmatpush2.msra.mxu0 0.0
        %1037 = vmatprep.subr.mxu0 0.0
        %1038 = vmatpush2.msra.mxu0 0.0
        %1039 = vmatprep.subr.mxu0 0.0
        %1040 = vmatpush2.msra.mxu0 0.0
        %1041 = vmatprep.subr.mxu0 0.0
        %1042 = vmatpush2.msra.mxu0 0.0
        %1043 = vmatprep.subr.mxu0 0.0
        %1044 = vmatpush2.msra.mxu0 0.0
        %1045 = vmatprep.mubr.f32.mxu0 0.0
        %1046 = vmatmul.mubr.f32.gmra.mxu0 %v979
        %v1047 = vpop.f32.mrf.mxu0
        %v1048 = vadd.f32 %v316, %v1047
        %v1049 = vpop.f32.mrf.mxu0
        %1050 = vdwg.mxu0
        %v1051 = vxor.u32 %v1048, 2147483648
        %v1052 = vmul.f32 %v1051, 1.442695
        %v1053 = vpow.pop %v1052
        %v1054 = vadd.f32 %v1053, 1.0
        %v1055 = vrcp.pop %v1054
        %v1056 = vmul.f32 1.0, %v1055
        %v1057 = vtanh.pop %v1048
        %v1058 = vmul.f32 %v1056, %v854
        %1060 = vrot.lane.b32.xlu0 %v1057, 32
        %v1061 = vpop.permute.xlu0 %1060
        %v1063 = vmul.f32 %v1056, %v1061
        %1065 = vrot.lane.b32.xlu0 %v1063, 32
        %v1066 = vpop.permute.xlu0 %1065
        %v1068 = vadd.f32 %v1058, %v1066
        %v1069 = vtanh.pop %v1068
        %1071 = vrot.lane.b32.xlu0 %v1069, 32
        %v1072 = vpop.permute.xlu0 %1071
        %v1074 = vmul.f32 %v1056, %v1072
        %1076 = vrot.lane.b32.xlu0 %v1074, 64
        %v1077 = vpop.permute.xlu0 %1076
        %1079 = vrot.lane.b32.xlu0 %v965, 96
        %v1080 = vpop.permute.xlu0 %1079
        %v1082 = vsel %vm428, %v1077, %v1080
        %v1084 = vsel %vm436, %v1082, 0
        %1086 = vmatprep.subr.mxu0 0.0
        %1087 = vmatpush1.msra.mxu0 0.0
        %1088 = vmatprep.subr.mxu0 0.0
        %1089 = vmatpush1.msra.mxu0 0.0
        %1090 = vmatprep.subr.mxu0 0.0
        %1091 = vmatpush1.msra.mxu0 0.0
        %1092 = vmatprep.subr.mxu0 0.0
        %1093 = vmatpush1.msra.mxu0 0.0
        %1094 = vmatprep.subr.mxu0 0.0
        %1095 = vmatpush1.msra.mxu0 0.0
        %1096 = vmatprep.subr.mxu0 0.0
        %1097 = vmatpush1.msra.mxu0 0.0
        %1098 = vmatprep.subr.mxu0 0.0
        %1099 = vmatpush1.msra.mxu0 0.0
        %1100 = vmatprep.subr.mxu0 0.0
        %1101 = vmatpush1.msra.mxu0 0.0
        %1102 = vmatprep.subr.mxu0 0.0
        %1103 = vmatpush1.msra.mxu0 %v296
        %1104 = vmatprep.subr.mxu0 0.0
        %1105 = vmatpush1.msra.mxu0 %v295
        %1106 = vmatprep.subr.mxu0 0.0
        %1107 = vmatpush1.msra.mxu0 %v294
        %1108 = vmatprep.subr.mxu0 0.0
        %1109 = vmatpush1.msra.mxu0 %v293
        %1110 = vmatprep.subr.mxu0 0.0
        %1111 = vmatpush1.msra.mxu0 %v292
        %1112 = vmatprep.subr.mxu0 0.0
        %1113 = vmatpush1.msra.mxu0 %v291
        %1114 = vmatprep.subr.mxu0 0.0
        %1115 = vmatpush1.msra.mxu0 %v290
        %1116 = vmatprep.subr.mxu0 0.0
        %1117 = vmatpush1.msra.mxu0 %v289
        %1118 = vmatprep.subr.mxu0 0.0
        %1119 = vmatpush2.msra.mxu0 0.0
        %1120 = vmatprep.subr.mxu0 0.0
        %1121 = vmatpush2.msra.mxu0 0.0
        %1122 = vmatprep.subr.mxu0 0.0
        %1123 = vmatpush2.msra.mxu0 0.0
        %1124 = vmatprep.subr.mxu0 0.0
        %1125 = vmatpush2.msra.mxu0 0.0
        %1126 = vmatprep.subr.mxu0 0.0
        %1127 = vmatpush2.msra.mxu0 0.0
        %1128 = vmatprep.subr.mxu0 0.0
        %1129 = vmatpush2.msra.mxu0 0.0
        %1130 = vmatprep.subr.mxu0 0.0
        %1131 = vmatpush2.msra.mxu0 0.0
        %1132 = vmatprep.subr.mxu0 0.0
        %1133 = vmatpush2.msra.mxu0 0.0
        %1134 = vmatprep.subr.mxu0 0.0
        %1135 = vmatpush2.msra.mxu0 0.0
        %1136 = vmatprep.subr.mxu0 0.0
        %1137 = vmatpush2.msra.mxu0 0.0
        %1138 = vmatprep.subr.mxu0 0.0
        %1139 = vmatpush2.msra.mxu0 0.0
        %1140 = vmatprep.subr.mxu0 0.0
        %1141 = vmatpush2.msra.mxu0 0.0
        %1142 = vmatprep.subr.mxu0 0.0
        %1143 = vmatpush2.msra.mxu0 0.0
        %1144 = vmatprep.subr.mxu0 0.0
        %1145 = vmatpush2.msra.mxu0 0.0
        %1146 = vmatprep.subr.mxu0 0.0
        %1147 = vmatpush2.msra.mxu0 0.0
        %1148 = vmatprep.subr.mxu0 0.0
        %1149 = vmatpush2.msra.mxu0 0.0
        %1150 = vmatprep.mubr.f32.mxu0 0.0
        %1151 = vmatmul.mubr.f32.gmra.mxu0 %v1084
        %v1152 = vpop.f32.mrf.mxu0
        %v1153 = vadd.f32 %v434, %v1152
        %v1154 = vpop.f32.mrf.mxu0
        %1155 = vdwg.mxu0
        %v1156 = vxor.u32 %v1153, 2147483648
        %v1157 = vmul.f32 %v1156, 1.442695
        %v1158 = vpow.pop %v1157
        %v1159 = vadd.f32 %v1158, 1.0
        %v1160 = vrcp.pop %v1159
        %v1161 = vmul.f32 1.0, %v1160
        %v1162 = vtanh.pop %v1153
        %v1163 = vmul.f32 %v1161, %v959
        %1165 = vrot.lane.b32.xlu0 %v1162, 32
        %v1166 = vpop.permute.xlu0 %1165
        %v1168 = vmul.f32 %v1161, %v1166
        %1170 = vrot.lane.b32.xlu0 %v1168, 32
        %v1171 = vpop.permute.xlu0 %1170
        %v1173 = vadd.f32 %v1163, %v1171
        %v1174 = vtanh.pop %v1173
        %1176 = vrot.lane.b32.xlu0 %v1174, 32
        %v1177 = vpop.permute.xlu0 %1176
        %v1179 = vmul.f32 %v1161, %v1177
        %1181 = vrot.lane.b32.xlu0 %v1179, 64
        %v1182 = vpop.permute.xlu0 %1181
        %s1184 = scalar_lea.vmem %s271, 6 [#allocation10]
        %1185 = vst.msk [vmem:[%s1184] sm:$0x3] %vm542, %v1182
        %s1186 = scalar_lea.vmem %s237, 8 [#allocation4]
        %v1187 = vld [vmem:[%s1186] sm:$0x3]
        %1188 = vrot.lane.b32.xlu0 %v1074, 80
        %v1189 = vpop.permute.xlu0 %1188
        %v1191 = vsel %vm310, %v1187, %v1189
        %v1193 = vsel %vm318, %v1191, 0
        %1195 = vmatprep.subr.mxu0 0.0
        %1196 = vmatpush1.msra.mxu0 0.0
        %1197 = vmatprep.subr.mxu0 0.0
        %1198 = vmatpush1.msra.mxu0 0.0
        %1199 = vmatprep.subr.mxu0 0.0
        %1200 = vmatpush1.msra.mxu0 0.0
        %1201 = vmatprep.subr.mxu0 0.0
        %1202 = vmatpush1.msra.mxu0 0.0
        %1203 = vmatprep.subr.mxu0 0.0
        %1204 = vmatpush1.msra.mxu0 0.0
        %1205 = vmatprep.subr.mxu0 0.0
        %1206 = vmatpush1.msra.mxu0 0.0
        %1207 = vmatprep.subr.mxu0 0.0
        %1208 = vmatpush1.msra.mxu0 0.0
        %1209 = vmatprep.subr.mxu0 0.0
        %1210 = vmatpush1.msra.mxu0 0.0
        %1211 = vmatprep.subr.mxu0 0.0
        %1212 = vmatpush1.msra.mxu0 0.0
        %1213 = vmatprep.subr.mxu0 0.0
        %1214 = vmatpush1.msra.mxu0 0.0
        %1215 = vmatprep.subr.mxu0 0.0
        %1216 = vmatpush1.msra.mxu0 %v288
        %1217 = vmatprep.subr.mxu0 0.0
        %1218 = vmatpush1.msra.mxu0 %v287
        %1219 = vmatprep.subr.mxu0 0.0
        %1220 = vmatpush1.msra.mxu0 %v286
        %1221 = vmatprep.subr.mxu0 0.0
        %1222 = vmatpush1.msra.mxu0 %v285
        %1223 = vmatprep.subr.mxu0 0.0
        %1224 = vmatpush1.msra.mxu0 %v284
        %1225 = vmatprep.subr.mxu0 0.0
        %1226 = vmatpush1.msra.mxu0 %v283
        %1227 = vmatprep.subr.mxu0 0.0
        %1228 = vmatpush2.msra.mxu0 0.0
        %1229 = vmatprep.subr.mxu0 0.0
        %1230 = vmatpush2.msra.mxu0 0.0
        %1231 = vmatprep.subr.mxu0 0.0
        %1232 = vmatpush2.msra.mxu0 0.0
        %1233 = vmatprep.subr.mxu0 0.0
        %1234 = vmatpush2.msra.mxu0 0.0
        %1235 = vmatprep.subr.mxu0 0.0
        %1236 = vmatpush2.msra.mxu0 0.0
        %1237 = vmatprep.subr.mxu0 0.0
        %1238 = vmatpush2.msra.mxu0 0.0
        %1239 = vmatprep.subr.mxu0 0.0
        %1240 = vmatpush2.msra.mxu0 0.0
        %1241 = vmatprep.subr.mxu0 0.0
        %1242 = vmatpush2.msra.mxu0 0.0
        %1243 = vmatprep.subr.mxu0 0.0
        %1244 = vmatpush2.msra.mxu0 0.0
        %1245 = vmatprep.subr.mxu0 0.0
        %1246 = vmatpush2.msra.mxu0 0.0
        %1247 = vmatprep.subr.mxu0 0.0
        %1248 = vmatpush2.msra.mxu0 0.0
        %1249 = vmatprep.subr.mxu0 0.0
        %1250 = vmatpush2.msra.mxu0 0.0
        %1251 = vmatprep.subr.mxu0 0.0
        %1252 = vmatpush2.msra.mxu0 0.0
        %1253 = vmatprep.subr.mxu0 0.0
        %1254 = vmatpush2.msra.mxu0 0.0
        %1255 = vmatprep.subr.mxu0 0.0
        %1256 = vmatpush2.msra.mxu0 0.0
        %1257 = vmatprep.subr.mxu0 0.0
        %1258 = vmatpush2.msra.mxu0 0.0
        %1259 = vmatprep.mubr.f32.mxu0 0.0
        %1260 = vmatmul.mubr.f32.gmra.mxu0 %v1193
        %v1261 = vpop.f32.mrf.mxu0
        %v1262 = vadd.f32 %v316, %v1261
        %v1263 = vpop.f32.mrf.mxu0
        %1264 = vdwg.mxu0
        %v1265 = vxor.u32 %v1262, 2147483648
        %v1266 = vmul.f32 %v1265, 1.442695
        %v1267 = vpow.pop %v1266
        %v1268 = vadd.f32 %v1267, 1.0
        %v1269 = vrcp.pop %v1268
        %v1270 = vmul.f32 1.0, %v1269
        %v1271 = vtanh.pop %v1262
        %v1272 = vmul.f32 %v1270, %v1068
        %1274 = vrot.lane.b32.xlu0 %v1271, 32
        %v1275 = vpop.permute.xlu0 %1274
        %v1277 = vmul.f32 %v1270, %v1275
        %1279 = vrot.lane.b32.xlu0 %v1277, 32
        %v1280 = vpop.permute.xlu0 %1279
        %v1282 = vadd.f32 %v1272, %v1280
        %v1283 = vtanh.pop %v1282
        %1285 = vrot.lane.b32.xlu0 %v1283, 32
        %v1286 = vpop.permute.xlu0 %1285
        %v1288 = vmul.f32 %v1270, %v1286
        %1290 = vrot.lane.b32.xlu0 %v1288, 64
        %v1291 = vpop.permute.xlu0 %1290
        %1293 = vrot.lane.b32.xlu0 %v1179, 96
        %v1294 = vpop.permute.xlu0 %1293
        %v1296 = vsel %vm428, %v1291, %v1294
        %v1298 = vsel %vm436, %v1296, 0
        %1300 = vmatprep.subr.mxu0 0.0
        %1301 = vmatpush1.msra.mxu0 0.0
        %1302 = vmatprep.subr.mxu0 0.0
        %1303 = vmatpush1.msra.mxu0 0.0
        %1304 = vmatprep.subr.mxu0 0.0
        %1305 = vmatpush1.msra.mxu0 0.0
        %1306 = vmatprep.subr.mxu0 0.0
        %1307 = vmatpush1.msra.mxu0 0.0
        %1308 = vmatprep.subr.mxu0 0.0
        %1309 = vmatpush1.msra.mxu0 0.0
        %1310 = vmatprep.subr.mxu0 0.0
        %1311 = vmatpush1.msra.mxu0 0.0
        %1312 = vmatprep.subr.mxu0 0.0
        %1313 = vmatpush1.msra.mxu0 0.0
        %1314 = vmatprep.subr.mxu0 0.0
        %1315 = vmatpush1.msra.mxu0 0.0
        %1316 = vmatprep.subr.mxu0 0.0
        %1317 = vmatpush1.msra.mxu0 %v296
        %1318 = vmatprep.subr.mxu0 0.0
        %1319 = vmatpush1.msra.mxu0 %v295
        %1320 = vmatprep.subr.mxu0 0.0
        %1321 = vmatpush1.msra.mxu0 %v294
        %1322 = vmatprep.subr.mxu0 0.0
        %1323 = vmatpush1.msra.mxu0 %v293
        %1324 = vmatprep.subr.mxu0 0.0
        %1325 = vmatpush1.msra.mxu0 %v292
        %1326 = vmatprep.subr.mxu0 0.0
        %1327 = vmatpush1.msra.mxu0 %v291
        %1328 = vmatprep.subr.mxu0 0.0
        %1329 = vmatpush1.msra.mxu0 %v290
        %1330 = vmatprep.subr.mxu0 0.0
        %1331 = vmatpush1.msra.mxu0 %v289
        %1332 = vmatprep.subr.mxu0 0.0
        %1333 = vmatpush2.msra.mxu0 0.0
        %1334 = vmatprep.subr.mxu0 0.0
        %1335 = vmatpush2.msra.mxu0 0.0
        %1336 = vmatprep.subr.mxu0 0.0
        %1337 = vmatpush2.msra.mxu0 0.0
        %1338 = vmatprep.subr.mxu0 0.0
        %1339 = vmatpush2.msra.mxu0 0.0
        %1340 = vmatprep.subr.mxu0 0.0
        %1341 = vmatpush2.msra.mxu0 0.0
        %1342 = vmatprep.subr.mxu0 0.0
        %1343 = vmatpush2.msra.mxu0 0.0
        %1344 = vmatprep.subr.mxu0 0.0
        %1345 = vmatpush2.msra.mxu0 0.0
        %1346 = vmatprep.subr.mxu0 0.0
        %1347 = vmatpush2.msra.mxu0 0.0
        %1348 = vmatprep.subr.mxu0 0.0
        %1349 = vmatpush2.msra.mxu0 0.0
        %1350 = vmatprep.subr.mxu0 0.0
        %1351 = vmatpush2.msra.mxu0 0.0
        %1352 = vmatprep.subr.mxu0 0.0
        %1353 = vmatpush2.msra.mxu0 0.0
        %1354 = vmatprep.subr.mxu0 0.0
        %1355 = vmatpush2.msra.mxu0 0.0
        %1356 = vmatprep.subr.mxu0 0.0
        %1357 = vmatpush2.msra.mxu0 0.0
        %1358 = vmatprep.subr.mxu0 0.0
        %1359 = vmatpush2.msra.mxu0 0.0
        %1360 = vmatprep.subr.mxu0 0.0
        %1361 = vmatpush2.msra.mxu0 0.0
        %1362 = vmatprep.subr.mxu0 0.0
        %1363 = vmatpush2.msra.mxu0 0.0
        %1364 = vmatprep.mubr.f32.mxu0 0.0
        %1365 = vmatmul.mubr.f32.gmra.mxu0 %v1298
        %v1366 = vpop.f32.mrf.mxu0
        %v1367 = vadd.f32 %v434, %v1366
        %v1368 = vpop.f32.mrf.mxu0
        %1369 = vdwg.mxu0
        %v1370 = vxor.u32 %v1367, 2147483648
        %v1371 = vmul.f32 %v1370, 1.442695
        %v1372 = vpow.pop %v1371
        %v1373 = vadd.f32 %v1372, 1.0
        %v1374 = vrcp.pop %v1373
        %v1375 = vmul.f32 1.0, %v1374
        %v1376 = vtanh.pop %v1367
        %v1377 = vmul.f32 %v1375, %v1173
        %1379 = vrot.lane.b32.xlu0 %v1376, 32
        %v1380 = vpop.permute.xlu0 %1379
        %v1382 = vmul.f32 %v1375, %v1380
        %1384 = vrot.lane.b32.xlu0 %v1382, 32
        %v1385 = vpop.permute.xlu0 %1384
        %v1387 = vadd.f32 %v1377, %v1385
        %v1388 = vtanh.pop %v1387
        %1390 = vrot.lane.b32.xlu0 %v1388, 32
        %v1391 = vpop.permute.xlu0 %1390
        %v1393 = vmul.f32 %v1375, %v1391
        %1395 = vrot.lane.b32.xlu0 %v1393, 64
        %v1396 = vpop.permute.xlu0 %1395
        %s1398 = scalar_lea.vmem %s271, 8 [#allocation10]
        %1399 = vst.msk [vmem:[%s1398] sm:$0x3] %vm542, %v1396
        %s1400 = scalar_lea.vmem %s237, 10 [#allocation4]
        %v1401 = vld [vmem:[%s1400] sm:$0x3]
        %1402 = vrot.lane.b32.xlu0 %v1288, 80
        %v1403 = vpop.permute.xlu0 %1402
        %v1405 = vsel %vm310, %v1401, %v1403
        %v1407 = vsel %vm318, %v1405, 0
        %1409 = vmatprep.subr.mxu0 0.0
        %1410 = vmatpush1.msra.mxu0 0.0
        %1411 = vmatprep.subr.mxu0 0.0
        %1412 = vmatpush1.msra.mxu0 0.0
        %1413 = vmatprep.subr.mxu0 0.0
        %1414 = vmatpush1.msra.mxu0 0.0
        %1415 = vmatprep.subr.mxu0 0.0
        %1416 = vmatpush1.msra.mxu0 0.0
        %1417 = vmatprep.subr.mxu0 0.0
        %1418 = vmatpush1.msra.mxu0 0.0
        %1419 = vmatprep.subr.mxu0 0.0
        %1420 = vmatpush1.msra.mxu0 0.0
        %1421 = vmatprep.subr.mxu0 0.0
        %1422 = vmatpush1.msra.mxu0 0.0
        %1423 = vmatprep.subr.mxu0 0.0
        %1424 = vmatpush1.msra.mxu0 0.0
        %1425 = vmatprep.subr.mxu0 0.0
        %1426 = vmatpush1.msra.mxu0 0.0
        %1427 = vmatprep.subr.mxu0 0.0
        %1428 = vmatpush1.msra.mxu0 0.0
        %1429 = vmatprep.subr.mxu0 0.0
        %1430 = vmatpush1.msra.mxu0 %v288
        %1431 = vmatprep.subr.mxu0 0.0
        %1432 = vmatpush1.msra.mxu0 %v287
        %1433 = vmatprep.subr.mxu0 0.0
        %1434 = vmatpush1.msra.mxu0 %v286
        %1435 = vmatprep.subr.mxu0 0.0
        %1436 = vmatpush1.msra.mxu0 %v285
        %1437 = vmatprep.subr.mxu0 0.0
        %1438 = vmatpush1.msra.mxu0 %v284
        %1439 = vmatprep.subr.mxu0 0.0
        %1440 = vmatpush1.msra.mxu0 %v283
        %1441 = vmatprep.subr.mxu0 0.0
        %1442 = vmatpush2.msra.mxu0 0.0
        %1443 = vmatprep.subr.mxu0 0.0
        %1444 = vmatpush2.msra.mxu0 0.0
        %1445 = vmatprep.subr.mxu0 0.0
        %1446 = vmatpush2.msra.mxu0 0.0
        %1447 = vmatprep.subr.mxu0 0.0
        %1448 = vmatpush2.msra.mxu0 0.0
        %1449 = vmatprep.subr.mxu0 0.0
        %1450 = vmatpush2.msra.mxu0 0.0
        %1451 = vmatprep.subr.mxu0 0.0
        %1452 = vmatpush2.msra.mxu0 0.0
        %1453 = vmatprep.subr.mxu0 0.0
        %1454 = vmatpush2.msra.mxu0 0.0
        %1455 = vmatprep.subr.mxu0 0.0
        %1456 = vmatpush2.msra.mxu0 0.0
        %1457 = vmatprep.subr.mxu0 0.0
        %1458 = vmatpush2.msra.mxu0 0.0
        %1459 = vmatprep.subr.mxu0 0.0
        %1460 = vmatpush2.msra.mxu0 0.0
        %1461 = vmatprep.subr.mxu0 0.0
        %1462 = vmatpush2.msra.mxu0 0.0
        %1463 = vmatprep.subr.mxu0 0.0
        %1464 = vmatpush2.msra.mxu0 0.0
        %1465 = vmatprep.subr.mxu0 0.0
        %1466 = vmatpush2.msra.mxu0 0.0
        %1467 = vmatprep.subr.mxu0 0.0
        %1468 = vmatpush2.msra.mxu0 0.0
        %1469 = vmatprep.subr.mxu0 0.0
        %1470 = vmatpush2.msra.mxu0 0.0
        %1471 = vmatprep.subr.mxu0 0.0
        %1472 = vmatpush2.msra.mxu0 0.0
        %1473 = vmatprep.mubr.f32.mxu0 0.0
        %1474 = vmatmul.mubr.f32.gmra.mxu0 %v1407
        %v1475 = vpop.f32.mrf.mxu0
        %v1476 = vadd.f32 %v316, %v1475
        %v1477 = vpop.f32.mrf.mxu0
        %1478 = vdwg.mxu0
        %v1479 = vxor.u32 %v1476, 2147483648
        %v1480 = vmul.f32 %v1479, 1.442695
        %v1481 = vpow.pop %v1480
        %v1482 = vadd.f32 %v1481, 1.0
        %v1483 = vrcp.pop %v1482
        %v1484 = vmul.f32 1.0, %v1483
        %v1485 = vtanh.pop %v1476
        %v1486 = vmul.f32 %v1484, %v1282
        %1488 = vrot.lane.b32.xlu0 %v1485, 32
        %v1489 = vpop.permute.xlu0 %1488
        %v1491 = vmul.f32 %v1484, %v1489
        %1493 = vrot.lane.b32.xlu0 %v1491, 32
        %v1494 = vpop.permute.xlu0 %1493
        %v1496 = vadd.f32 %v1486, %v1494
        %v1497 = vtanh.pop %v1496
        %1499 = vrot.lane.b32.xlu0 %v1497, 32
        %v1500 = vpop.permute.xlu0 %1499
        %v1502 = vmul.f32 %v1484, %v1500
        %1504 = vrot.lane.b32.xlu0 %v1502, 64
        %v1505 = vpop.permute.xlu0 %1504
        %1507 = vrot.lane.b32.xlu0 %v1393, 96
        %v1508 = vpop.permute.xlu0 %1507
        %v1510 = vsel %vm428, %v1505, %v1508
        %v1512 = vsel %vm436, %v1510, 0
        %1514 = vmatprep.subr.mxu0 0.0
        %1515 = vmatpush1.msra.mxu0 0.0
        %1516 = vmatprep.subr.mxu0 0.0
        %1517 = vmatpush1.msra.mxu0 0.0
        %1518 = vmatprep.subr.mxu0 0.0
        %1519 = vmatpush1.msra.mxu0 0.0
        %1520 = vmatprep.subr.mxu0 0.0
        %1521 = vmatpush1.msra.mxu0 0.0
        %1522 = vmatprep.subr.mxu0 0.0
        %1523 = vmatpush1.msra.mxu0 0.0
        %1524 = vmatprep.subr.mxu0 0.0
        %1525 = vmatpush1.msra.mxu0 0.0
        %1526 = vmatprep.subr.mxu0 0.0
        %1527 = vmatpush1.msra.mxu0 0.0
        %1528 = vmatprep.subr.mxu0 0.0
        %1529 = vmatpush1.msra.mxu0 0.0
        %1530 = vmatprep.subr.mxu0 0.0
        %1531 = vmatpush1.msra.mxu0 %v296
        %1532 = vmatprep.subr.mxu0 0.0
        %1533 = vmatpush1.msra.mxu0 %v295
        %1534 = vmatprep.subr.mxu0 0.0
        %1535 = vmatpush1.msra.mxu0 %v294
        %1536 = vmatprep.subr.mxu0 0.0
        %1537 = vmatpush1.msra.mxu0 %v293
        %1538 = vmatprep.subr.mxu0 0.0
        %1539 = vmatpush1.msra.mxu0 %v292
        %1540 = vmatprep.subr.mxu0 0.0
        %1541 = vmatpush1.msra.mxu0 %v291
        %1542 = vmatprep.subr.mxu0 0.0
        %1543 = vmatpush1.msra.mxu0 %v290
        %1544 = vmatprep.subr.mxu0 0.0
        %1545 = vmatpush1.msra.mxu0 %v289
        %1546 = vmatprep.subr.mxu0 0.0
        %1547 = vmatpush2.msra.mxu0 0.0
        %1548 = vmatprep.subr.mxu0 0.0
        %1549 = vmatpush2.msra.mxu0 0.0
        %1550 = vmatprep.subr.mxu0 0.0
        %1551 = vmatpush2.msra.mxu0 0.0
        %1552 = vmatprep.subr.mxu0 0.0
        %1553 = vmatpush2.msra.mxu0 0.0
        %1554 = vmatprep.subr.mxu0 0.0
        %1555 = vmatpush2.msra.mxu0 0.0
        %1556 = vmatprep.subr.mxu0 0.0
        %1557 = vmatpush2.msra.mxu0 0.0
        %1558 = vmatprep.subr.mxu0 0.0
        %1559 = vmatpush2.msra.mxu0 0.0
        %1560 = vmatprep.subr.mxu0 0.0
        %1561 = vmatpush2.msra.mxu0 0.0
        %1562 = vmatprep.subr.mxu0 0.0
        %1563 = vmatpush2.msra.mxu0 0.0
        %1564 = vmatprep.subr.mxu0 0.0
        %1565 = vmatpush2.msra.mxu0 0.0
        %1566 = vmatprep.subr.mxu0 0.0
        %1567 = vmatpush2.msra.mxu0 0.0
        %1568 = vmatprep.subr.mxu0 0.0
        %1569 = vmatpush2.msra.mxu0 0.0
        %1570 = vmatprep.subr.mxu0 0.0
        %1571 = vmatpush2.msra.mxu0 0.0
        %1572 = vmatprep.subr.mxu0 0.0
        %1573 = vmatpush2.msra.mxu0 0.0
        %1574 = vmatprep.subr.mxu0 0.0
        %1575 = vmatpush2.msra.mxu0 0.0
        %1576 = vmatprep.subr.mxu0 0.0
        %1577 = vmatpush2.msra.mxu0 0.0
        %1578 = vmatprep.mubr.f32.mxu0 0.0
        %1579 = vmatmul.mubr.f32.gmra.mxu0 %v1512
        %v1580 = vpop.f32.mrf.mxu0
        %v1581 = vadd.f32 %v434, %v1580
        %v1582 = vpop.f32.mrf.mxu0
        %1583 = vdwg.mxu0
        %v1584 = vxor.u32 %v1581, 2147483648
        %v1585 = vmul.f32 %v1584, 1.442695
        %v1586 = vpow.pop %v1585
        %v1587 = vadd.f32 %v1586, 1.0
        %v1588 = vrcp.pop %v1587
        %v1589 = vmul.f32 1.0, %v1588
        %v1590 = vtanh.pop %v1581
        %v1591 = vmul.f32 %v1589, %v1387
        %1593 = vrot.lane.b32.xlu0 %v1590, 32
        %v1594 = vpop.permute.xlu0 %1593
        %v1596 = vmul.f32 %v1589, %v1594
        %1598 = vrot.lane.b32.xlu0 %v1596, 32
        %v1599 = vpop.permute.xlu0 %1598
        %v1601 = vadd.f32 %v1591, %v1599
        %v1602 = vtanh.pop %v1601
        %1604 = vrot.lane.b32.xlu0 %v1602, 32
        %v1605 = vpop.permute.xlu0 %1604
        %v1607 = vmul.f32 %v1589, %v1605
        %1609 = vrot.lane.b32.xlu0 %v1607, 64
        %v1610 = vpop.permute.xlu0 %1609
        %s1612 = scalar_lea.vmem %s271, 10 [#allocation10]
        %1613 = vst.msk [vmem:[%s1612] sm:$0x3] %vm542, %v1610
        %s1614 = scalar_lea.vmem %s237, 12 [#allocation4]
        %v1615 = vld [vmem:[%s1614] sm:$0x3]
        %1616 = vrot.lane.b32.xlu0 %v1502, 80
        %v1617 = vpop.permute.xlu0 %1616
        %v1619 = vsel %vm310, %v1615, %v1617
        %v1621 = vsel %vm318, %v1619, 0
        %1623 = vmatprep.subr.mxu0 0.0
        %1624 = vmatpush1.msra.mxu0 0.0
        %1625 = vmatprep.subr.mxu0 0.0
        %1626 = vmatpush1.msra.mxu0 0.0
        %1627 = vmatprep.subr.mxu0 0.0
        %1628 = vmatpush1.msra.mxu0 0.0
        %1629 = vmatprep.subr.mxu0 0.0
        %1630 = vmatpush1.msra.mxu0 0.0
        %1631 = vmatprep.subr.mxu0 0.0
        %1632 = vmatpush1.msra.mxu0 0.0
        %1633 = vmatprep.subr.mxu0 0.0
        %1634 = vmatpush1.msra.mxu0 0.0
        %1635 = vmatprep.subr.mxu0 0.0
        %1636 = vmatpush1.msra.mxu0 0.0
        %1637 = vmatprep.subr.mxu0 0.0
        %1638 = vmatpush1.msra.mxu0 0.0
        %1639 = vmatprep.subr.mxu0 0.0
        %1640 = vmatpush1.msra.mxu0 0.0
        %1641 = vmatprep.subr.mxu0 0.0
        %1642 = vmatpush1.msra.mxu0 0.0
        %1643 = vmatprep.subr.mxu0 0.0
        %1644 = vmatpush1.msra.mxu0 %v288
        %1645 = vmatprep.subr.mxu0 0.0
        %1646 = vmatpush1.msra.mxu0 %v287
        %1647 = vmatprep.subr.mxu0 0.0
        %1648 = vmatpush1.msra.mxu0 %v286
        %1649 = vmatprep.subr.mxu0 0.0
        %1650 = vmatpush1.msra.mxu0 %v285
        %1651 = vmatprep.subr.mxu0 0.0
        %1652 = vmatpush1.msra.mxu0 %v284
        %1653 = vmatprep.subr.mxu0 0.0
        %1654 = vmatpush1.msra.mxu0 %v283
        %1655 = vmatprep.subr.mxu0 0.0
        %1656 = vmatpush2.msra.mxu0 0.0
        %1657 = vmatprep.subr.mxu0 0.0
        %1658 = vmatpush2.msra.mxu0 0.0
        %1659 = vmatprep.subr.mxu0 0.0
        %1660 = vmatpush2.msra.mxu0 0.0
        %1661 = vmatprep.subr.mxu0 0.0
        %1662 = vmatpush2.msra.mxu0 0.0
        %1663 = vmatprep.subr.mxu0 0.0
        %1664 = vmatpush2.msra.mxu0 0.0
        %1665 = vmatprep.subr.mxu0 0.0
        %1666 = vmatpush2.msra.mxu0 0.0
        %1667 = vmatprep.subr.mxu0 0.0
        %1668 = vmatpush2.msra.mxu0 0.0
        %1669 = vmatprep.subr.mxu0 0.0
        %1670 = vmatpush2.msra.mxu0 0.0
        %1671 = vmatprep.subr.mxu0 0.0
        %1672 = vmatpush2.msra.mxu0 0.0
        %1673 = vmatprep.subr.mxu0 0.0
        %1674 = vmatpush2.msra.mxu0 0.0
        %1675 = vmatprep.subr.mxu0 0.0
        %1676 = vmatpush2.msra.mxu0 0.0
        %1677 = vmatprep.subr.mxu0 0.0
        %1678 = vmatpush2.msra.mxu0 0.0
        %1679 = vmatprep.subr.mxu0 0.0
        %1680 = vmatpush2.msra.mxu0 0.0
        %1681 = vmatprep.subr.mxu0 0.0
        %1682 = vmatpush2.msra.mxu0 0.0
        %1683 = vmatprep.subr.mxu0 0.0
        %1684 = vmatpush2.msra.mxu0 0.0
        %1685 = vmatprep.subr.mxu0 0.0
        %1686 = vmatpush2.msra.mxu0 0.0
        %1687 = vmatprep.mubr.f32.mxu0 0.0
        %1688 = vmatmul.mubr.f32.gmra.mxu0 %v1621
        %v1689 = vpop.f32.mrf.mxu0
        %v1690 = vadd.f32 %v316, %v1689
        %v1691 = vpop.f32.mrf.mxu0
        %1692 = vdwg.mxu0
        %v1693 = vxor.u32 %v1690, 2147483648
        %v1694 = vmul.f32 %v1693, 1.442695
        %v1695 = vpow.pop %v1694
        %v1696 = vadd.f32 %v1695, 1.0
        %v1697 = vrcp.pop %v1696
        %v1698 = vmul.f32 1.0, %v1697
        %v1699 = vtanh.pop %v1690
        %v1700 = vmul.f32 %v1698, %v1496
        %1702 = vrot.lane.b32.xlu0 %v1699, 32
        %v1703 = vpop.permute.xlu0 %1702
        %v1705 = vmul.f32 %v1698, %v1703
        %1707 = vrot.lane.b32.xlu0 %v1705, 32
        %v1708 = vpop.permute.xlu0 %1707
        %v1710 = vadd.f32 %v1700, %v1708
        %v1711 = vtanh.pop %v1710
        %1713 = vrot.lane.b32.xlu0 %v1711, 32
        %v1714 = vpop.permute.xlu0 %1713
        %v1716 = vmul.f32 %v1698, %v1714
        %1718 = vrot.lane.b32.xlu0 %v1716, 64
        %v1719 = vpop.permute.xlu0 %1718
        %1721 = vrot.lane.b32.xlu0 %v1607, 96
        %v1722 = vpop.permute.xlu0 %1721
        %v1724 = vsel %vm428, %v1719, %v1722
        %v1726 = vsel %vm436, %v1724, 0
        %1728 = vmatprep.subr.mxu0 0.0
        %1729 = vmatpush1.msra.mxu0 0.0
        %1730 = vmatprep.subr.mxu0 0.0
        %1731 = vmatpush1.msra.mxu0 0.0
        %1732 = vmatprep.subr.mxu0 0.0
        %1733 = vmatpush1.msra.mxu0 0.0
        %1734 = vmatprep.subr.mxu0 0.0
        %1735 = vmatpush1.msra.mxu0 0.0
        %1736 = vmatprep.subr.mxu0 0.0
        %1737 = vmatpush1.msra.mxu0 0.0
        %1738 = vmatprep.subr.mxu0 0.0
        %1739 = vmatpush1.msra.mxu0 0.0
        %1740 = vmatprep.subr.mxu0 0.0
        %1741 = vmatpush1.msra.mxu0 0.0
        %1742 = vmatprep.subr.mxu0 0.0
        %1743 = vmatpush1.msra.mxu0 0.0
        %1744 = vmatprep.subr.mxu0 0.0
        %1745 = vmatpush1.msra.mxu0 %v296
        %1746 = vmatprep.subr.mxu0 0.0
        %1747 = vmatpush1.msra.mxu0 %v295
        %1748 = vmatprep.subr.mxu0 0.0
        %1749 = vmatpush1.msra.mxu0 %v294
        %1750 = vmatprep.subr.mxu0 0.0
        %1751 = vmatpush1.msra.mxu0 %v293
        %1752 = vmatprep.subr.mxu0 0.0
        %1753 = vmatpush1.msra.mxu0 %v292
        %1754 = vmatprep.subr.mxu0 0.0
        %1755 = vmatpush1.msra.mxu0 %v291
        %1756 = vmatprep.subr.mxu0 0.0
        %1757 = vmatpush1.msra.mxu0 %v290
        %1758 = vmatprep.subr.mxu0 0.0
        %1759 = vmatpush1.msra.mxu0 %v289
        %1760 = vmatprep.subr.mxu0 0.0
        %1761 = vmatpush2.msra.mxu0 0.0
        %1762 = vmatprep.subr.mxu0 0.0
        %1763 = vmatpush2.msra.mxu0 0.0
        %1764 = vmatprep.subr.mxu0 0.0
        %1765 = vmatpush2.msra.mxu0 0.0
        %1766 = vmatprep.subr.mxu0 0.0
        %1767 = vmatpush2.msra.mxu0 0.0
        %1768 = vmatprep.subr.mxu0 0.0
        %1769 = vmatpush2.msra.mxu0 0.0
        %1770 = vmatprep.subr.mxu0 0.0
        %1771 = vmatpush2.msra.mxu0 0.0
        %1772 = vmatprep.subr.mxu0 0.0
        %1773 = vmatpush2.msra.mxu0 0.0
        %1774 = vmatprep.subr.mxu0 0.0
        %1775 = vmatpush2.msra.mxu0 0.0
        %1776 = vmatprep.subr.mxu0 0.0
        %1777 = vmatpush2.msra.mxu0 0.0
        %1778 = vmatprep.subr.mxu0 0.0
        %1779 = vmatpush2.msra.mxu0 0.0
        %1780 = vmatprep.subr.mxu0 0.0
        %1781 = vmatpush2.msra.mxu0 0.0
        %1782 = vmatprep.subr.mxu0 0.0
        %1783 = vmatpush2.msra.mxu0 0.0
        %1784 = vmatprep.subr.mxu0 0.0
        %1785 = vmatpush2.msra.mxu0 0.0
        %1786 = vmatprep.subr.mxu0 0.0
        %1787 = vmatpush2.msra.mxu0 0.0
        %1788 = vmatprep.subr.mxu0 0.0
        %1789 = vmatpush2.msra.mxu0 0.0
        %1790 = vmatprep.subr.mxu0 0.0
        %1791 = vmatpush2.msra.mxu0 0.0
        %1792 = vmatprep.mubr.f32.mxu0 0.0
        %1793 = vmatmul.mubr.f32.gmra.mxu0 %v1726
        %v1794 = vpop.f32.mrf.mxu0
        %v1795 = vadd.f32 %v434, %v1794
        %v1796 = vpop.f32.mrf.mxu0
        %1797 = vdwg.mxu0
        %v1798 = vxor.u32 %v1795, 2147483648
        %v1799 = vmul.f32 %v1798, 1.442695
        %v1800 = vpow.pop %v1799
        %v1801 = vadd.f32 %v1800, 1.0
        %v1802 = vrcp.pop %v1801
        %v1803 = vmul.f32 1.0, %v1802
        %v1804 = vtanh.pop %v1795
        %v1805 = vmul.f32 %v1803, %v1601
        %1807 = vrot.lane.b32.xlu0 %v1804, 32
        %v1808 = vpop.permute.xlu0 %1807
        %v1810 = vmul.f32 %v1803, %v1808
        %1812 = vrot.lane.b32.xlu0 %v1810, 32
        %v1813 = vpop.permute.xlu0 %1812
        %v1815 = vadd.f32 %v1805, %v1813
        %v1816 = vtanh.pop %v1815
        %1818 = vrot.lane.b32.xlu0 %v1816, 32
        %v1819 = vpop.permute.xlu0 %1818
        %v1821 = vmul.f32 %v1803, %v1819
        %1823 = vrot.lane.b32.xlu0 %v1821, 64
        %v1824 = vpop.permute.xlu0 %1823
        %s1826 = scalar_lea.vmem %s271, 12 [#allocation10]
        %1827 = vst.msk [vmem:[%s1826] sm:$0x3] %vm542, %v1824
        %s1828 = scalar_lea.vmem %s237, 14 [#allocation4]
        %v1829 = vld [vmem:[%s1828] sm:$0x3]
        %1830 = vrot.lane.b32.xlu0 %v1716, 80
        %v1831 = vpop.permute.xlu0 %1830
        %v1833 = vsel %vm310, %v1829, %v1831
        %v1835 = vsel %vm318, %v1833, 0
        %1837 = vmatprep.subr.mxu0 0.0
        %1838 = vmatpush1.msra.mxu0 0.0
        %1839 = vmatprep.subr.mxu0 0.0
        %1840 = vmatpush1.msra.mxu0 0.0
        %1841 = vmatprep.subr.mxu0 0.0
        %1842 = vmatpush1.msra.mxu0 0.0
        %1843 = vmatprep.subr.mxu0 0.0
        %1844 = vmatpush1.msra.mxu0 0.0
        %1845 = vmatprep.subr.mxu0 0.0
        %1846 = vmatpush1.msra.mxu0 0.0
        %1847 = vmatprep.subr.mxu0 0.0
        %1848 = vmatpush1.msra.mxu0 0.0
        %1849 = vmatprep.subr.mxu0 0.0
        %1850 = vmatpush1.msra.mxu0 0.0
        %1851 = vmatprep.subr.mxu0 0.0
        %1852 = vmatpush1.msra.mxu0 0.0
        %1853 = vmatprep.subr.mxu0 0.0
        %1854 = vmatpush1.msra.mxu0 0.0
        %1855 = vmatprep.subr.mxu0 0.0
        %1856 = vmatpush1.msra.mxu0 0.0
        %1857 = vmatprep.subr.mxu0 0.0
        %1858 = vmatpush1.msra.mxu0 %v288
        %1859 = vmatprep.subr.mxu0 0.0
        %1860 = vmatpush1.msra.mxu0 %v287
        %1861 = vmatprep.subr.mxu0 0.0
        %1862 = vmatpush1.msra.mxu0 %v286
        %1863 = vmatprep.subr.mxu0 0.0
        %1864 = vmatpush1.msra.mxu0 %v285
        %1865 = vmatprep.subr.mxu0 0.0
        %1866 = vmatpush1.msra.mxu0 %v284
        %1867 = vmatprep.subr.mxu0 0.0
        %1868 = vmatpush1.msra.mxu0 %v283
        %1869 = vmatprep.subr.mxu0 0.0
        %1870 = vmatpush2.msra.mxu0 0.0
        %1871 = vmatprep.subr.mxu0 0.0
        %1872 = vmatpush2.msra.mxu0 0.0
        %1873 = vmatprep.subr.mxu0 0.0
        %1874 = vmatpush2.msra.mxu0 0.0
        %1875 = vmatprep.subr.mxu0 0.0
        %1876 = vmatpush2.msra.mxu0 0.0
        %1877 = vmatprep.subr.mxu0 0.0
        %1878 = vmatpush2.msra.mxu0 0.0
        %1879 = vmatprep.subr.mxu0 0.0
        %1880 = vmatpush2.msra.mxu0 0.0
        %1881 = vmatprep.subr.mxu0 0.0
        %1882 = vmatpush2.msra.mxu0 0.0
        %1883 = vmatprep.subr.mxu0 0.0
        %1884 = vmatpush2.msra.mxu0 0.0
        %1885 = vmatprep.subr.mxu0 0.0
        %1886 = vmatpush2.msra.mxu0 0.0
        %1887 = vmatprep.subr.mxu0 0.0
        %1888 = vmatpush2.msra.mxu0 0.0
        %1889 = vmatprep.subr.mxu0 0.0
        %1890 = vmatpush2.msra.mxu0 0.0
        %1891 = vmatprep.subr.mxu0 0.0
        %1892 = vmatpush2.msra.mxu0 0.0
        %1893 = vmatprep.subr.mxu0 0.0
        %1894 = vmatpush2.msra.mxu0 0.0
        %1895 = vmatprep.subr.mxu0 0.0
        %1896 = vmatpush2.msra.mxu0 0.0
        %1897 = vmatprep.subr.mxu0 0.0
        %1898 = vmatpush2.msra.mxu0 0.0
        %1899 = vmatprep.subr.mxu0 0.0
        %1900 = vmatpush2.msra.mxu0 0.0
        %1901 = vmatprep.mubr.f32.mxu0 0.0
        %1902 = vmatmul.mubr.f32.gmra.mxu0 %v1835
        %v1903 = vpop.f32.mrf.mxu0
        %v1904 = vadd.f32 %v316, %v1903
        %v1905 = vpop.f32.mrf.mxu0
        %1906 = vdwg.mxu0
        %v1907 = vxor.u32 %v1904, 2147483648
        %v1908 = vmul.f32 %v1907, 1.442695
        %v1909 = vpow.pop %v1908
        %v1910 = vadd.f32 %v1909, 1.0
        %v1911 = vrcp.pop %v1910
        %v1912 = vmul.f32 1.0, %v1911
        %v1913 = vtanh.pop %v1904
        %v1914 = vmul.f32 %v1912, %v1710
        %1916 = vrot.lane.b32.xlu0 %v1913, 32
        %v1917 = vpop.permute.xlu0 %1916
        %v1919 = vmul.f32 %v1912, %v1917
        %1921 = vrot.lane.b32.xlu0 %v1919, 32
        %v1922 = vpop.permute.xlu0 %1921
        %v1924 = vadd.f32 %v1914, %v1922
        %v1925 = vtanh.pop %v1924
        %1927 = vrot.lane.b32.xlu0 %v1925, 32
        %v1928 = vpop.permute.xlu0 %1927
        %v1930 = vmul.f32 %v1912, %v1928
        %1932 = vrot.lane.b32.xlu0 %v1930, 64
        %v1933 = vpop.permute.xlu0 %1932
        %1935 = vrot.lane.b32.xlu0 %v1821, 96
        %v1936 = vpop.permute.xlu0 %1935
        %v1938 = vsel %vm428, %v1933, %v1936
        %v1940 = vsel %vm436, %v1938, 0
        %1942 = vmatprep.subr.mxu0 0.0
        %1943 = vmatpush1.msra.mxu0 0.0
        %1944 = vmatprep.subr.mxu0 0.0
        %1945 = vmatpush1.msra.mxu0 0.0
        %1946 = vmatprep.subr.mxu0 0.0
        %1947 = vmatpush1.msra.mxu0 0.0
        %1948 = vmatprep.subr.mxu0 0.0
        %1949 = vmatpush1.msra.mxu0 0.0
        %1950 = vmatprep.subr.mxu0 0.0
        %1951 = vmatpush1.msra.mxu0 0.0
        %1952 = vmatprep.subr.mxu0 0.0
        %1953 = vmatpush1.msra.mxu0 0.0
        %1954 = vmatprep.subr.mxu0 0.0
        %1955 = vmatpush1.msra.mxu0 0.0
        %1956 = vmatprep.subr.mxu0 0.0
        %1957 = vmatpush1.msra.mxu0 0.0
        %1958 = vmatprep.subr.mxu0 0.0
        %1959 = vmatpush1.msra.mxu0 %v296
        %1960 = vmatprep.subr.mxu0 0.0
        %1961 = vmatpush1.msra.mxu0 %v295
        %1962 = vmatprep.subr.mxu0 0.0
        %1963 = vmatpush1.msra.mxu0 %v294
        %1964 = vmatprep.subr.mxu0 0.0
        %1965 = vmatpush1.msra.mxu0 %v293
        %1966 = vmatprep.subr.mxu0 0.0
        %1967 = vmatpush1.msra.mxu0 %v292
        %1968 = vmatprep.subr.mxu0 0.0
        %1969 = vmatpush1.msra.mxu0 %v291
        %1970 = vmatprep.subr.mxu0 0.0
        %1971 = vmatpush1.msra.mxu0 %v290
        %1972 = vmatprep.subr.mxu0 0.0
        %1973 = vmatpush1.msra.mxu0 %v289
        %1974 = vmatprep.subr.mxu0 0.0
        %1975 = vmatpush2.msra.mxu0 0.0
        %1976 = vmatprep.subr.mxu0 0.0
        %1977 = vmatpush2.msra.mxu0 0.0
        %1978 = vmatprep.subr.mxu0 0.0
        %1979 = vmatpush2.msra.mxu0 0.0
        %1980 = vmatprep.subr.mxu0 0.0
        %1981 = vmatpush2.msra.mxu0 0.0
        %1982 = vmatprep.subr.mxu0 0.0
        %1983 = vmatpush2.msra.mxu0 0.0
        %1984 = vmatprep.subr.mxu0 0.0
        %1985 = vmatpush2.msra.mxu0 0.0
        %1986 = vmatprep.subr.mxu0 0.0
        %1987 = vmatpush2.msra.mxu0 0.0
        %1988 = vmatprep.subr.mxu0 0.0
        %1989 = vmatpush2.msra.mxu0 0.0
        %1990 = vmatprep.subr.mxu0 0.0
        %1991 = vmatpush2.msra.mxu0 0.0
        %1992 = vmatprep.subr.mxu0 0.0
        %1993 = vmatpush2.msra.mxu0 0.0
        %1994 = vmatprep.subr.mxu0 0.0
        %1995 = vmatpush2.msra.mxu0 0.0
        %1996 = vmatprep.subr.mxu0 0.0
        %1997 = vmatpush2.msra.mxu0 0.0
        %1998 = vmatprep.subr.mxu0 0.0
        %1999 = vmatpush2.msra.mxu0 0.0
        %2000 = vmatprep.subr.mxu0 0.0
        %2001 = vmatpush2.msra.mxu0 0.0
        %2002 = vmatprep.subr.mxu0 0.0
        %2003 = vmatpush2.msra.mxu0 0.0
        %2004 = vmatprep.subr.mxu0 0.0
        %2005 = vmatpush2.msra.mxu0 0.0
        %2006 = vmatprep.mubr.f32.mxu0 0.0
        %2007 = vmatmul.mubr.f32.gmra.mxu0 %v1940
        %v2008 = vpop.f32.mrf.mxu0
        %v2009 = vadd.f32 %v434, %v2008
        %v2010 = vpop.f32.mrf.mxu0
        %2011 = vdwg.mxu0
        %v2012 = vxor.u32 %v2009, 2147483648
        %v2013 = vmul.f32 %v2012, 1.442695
        %v2014 = vpow.pop %v2013
        %v2015 = vadd.f32 %v2014, 1.0
        %v2016 = vrcp.pop %v2015
        %v2017 = vmul.f32 1.0, %v2016
        %v2018 = vtanh.pop %v2009
        %v2019 = vmul.f32 %v2017, %v1815
        %2021 = vrot.lane.b32.xlu0 %v2018, 32
        %v2022 = vpop.permute.xlu0 %2021
        %v2024 = vmul.f32 %v2017, %v2022
        %2026 = vrot.lane.b32.xlu0 %v2024, 32
        %v2027 = vpop.permute.xlu0 %2026
        %v2029 = vadd.f32 %v2019, %v2027
        %v2030 = vtanh.pop %v2029
        %2032 = vrot.lane.b32.xlu0 %v2030, 32
        %v2033 = vpop.permute.xlu0 %2032
        %v2035 = vmul.f32 %v2017, %v2033
        %2037 = vrot.lane.b32.xlu0 %v2035, 64
        %v2038 = vpop.permute.xlu0 %2037
        %s2040 = scalar_lea.vmem %s271, 14 [#allocation10]
        %2041 = vst.msk [vmem:[%s2040] sm:$0x3] %vm542, %v2038
        %2042 = vst.msk [vmem:[#allocation2] sm:$0x3] %vm542, %v1933
        %2044 = vrot.lane.b32.xlu0 %v1924, 96
        %v2045 = vpop.permute.xlu0 %2044
        %2047 = vst.msk [vmem:[#allocation3] sm:$0x3] %vm542, %v2045
        %2048 = vst.msk [vmem:[%s300] sm:$0x3] %vm542, %v2038
        %2050 = vrot.lane.b32.xlu0 %v2029, 96
        %v2051 = vpop.permute.xlu0 %2050
        %2053 = vst.msk [vmem:[%s303] sm:$0x3] %vm542, %v2051
        %s2054 = sand.u32 %s141, 1
        %s2055 = scalar_lea.sflag [#allocation6], %s2054
        %s2056 = sand.u32 %s141, 1
        %s2057 = smul.addr %s2056, 16
        %s2058 = scalar_lea.vmem [#allocation10], %s2057
        // Predicated region
        $region57: #{tpu_custom_call.1} parent=39 // pred_check
          %p2059 = pneg %p151
        $region58: #{tpu_custom_call.1} parent=39 // pred_check_branch
          %2061 = sbr.rel (%p2059) target = $region60
        $region59: #{tpu_custom_call.1} parent=39 // pred_region
          %s2062 = smul.u32 8, %s23
          %s2064 = ssub.s32 256, 256
          %2065 = vsyncadd %s2055, %s2064
          %s2066 = smul.addr %s2062, 32
          %s2067 = scalar_lea.hbm %s5, %s2066
          %s2068 = sshll.u32 %s2058, 4
          %s2069 = int_to_ptr.vmem [resolvable:$true] %s2068
          %2074 = dma.vmem_to_hbm [thread:$0]  %s2069, 256, %s2067, %s2055, 32, 32, 2
        $region60: #{tpu_custom_call.1} parent=39 // pred_fallthru
          _
      $region40: #{tpu_custom_call.1} parent=5 // pred_fallthru
        _
      %p2075 = scmp.le.s32.totalorder 2, %s18
      // Predicated region
      $region61: #{tpu_custom_call.1} parent=5 // pred_check
        %p2076 = pneg %p2075
      $region62: #{tpu_custom_call.1} parent=5 // pred_check_branch
        %2078 = sbr.rel (%p2076) target = $region64
      $region63: #{tpu_custom_call.1} parent=5 // pred_region
        %s2079 = ssub.s32 %s18, 2
        // Predicated region
        $region65: #{tpu_custom_call.1} parent=63 // pred_check
          %p2080 = pneg %p157
        $region66: #{tpu_custom_call.1} parent=63 // pred_check_branch
          %2082 = sbr.rel (%p2080) target = $region68
        $region67: #{tpu_custom_call.1} parent=63 // pred_region
          %s2083 = sand.u32 %s142, 1
          %s2084 = scalar_lea.sflag [#allocation6], %s2083
          %s2085 = sand.u32 %s142, 1
          %s2086 = smul.addr %s2085, 16
          %s2087 = scalar_lea.vmem [#allocation10], %s2086
          %2088 = dma.done %s2084, 256
        $region68: #{tpu_custom_call.1} parent=63 // pred_fallthru
          _
      $region64: #{tpu_custom_call.1} parent=5 // pred_fallthru
        _
    $region6: #{tpu_custom_call.1} parent=1 // loop_footer
      %s22 = sadd.s32 1, %s18
    $region7: #{tpu_custom_call.1} parent=1 // loop_footer_branch
      %17 = sbr.rel target = $region3
    $region8: #{tpu_custom_call.1} parent=1 // loop_exit
      _
    %2089 = vsyncpa [#allocation5], 1
    %s2090 = scalar_lea.sflag [#allocation5], 1
    %2091 = vsyncpa %s2090, 1
    %2092 = vsyncpa [#allocation8], 1
    %2093 = vsyncpa [#allocation6], 1
    %s2094 = scalar_lea.sflag [#allocation6], 1
    %2095 = vsyncpa %s2094, 1

</llo_original>
